<compile_context>
chip_gen: v7x
topology: tpu7x:2x2x1
jax: 0.10.0
libtpu: 0.0.40
codegen_flags: <defaults>
</compile_context>

<pallas_src>
import jax
import jax.numpy as jnp
from jax import lax
from jax.experimental import pallas as pl
from jax.experimental.pallas import tpu as pltpu

# Logical ("true") sizes of the synthetic inner network.
F_IN = 16    # input feature size
H = 32       # hidden size of layer1 / layer2 (layer2 feeds the 'rec' placeholder)
F_OUT = 16   # output feature size
B = 2        # batch
T = 8        # sequence length fused into one kernel call

# Padded, lane/sublane-dense sizes used inside the kernel.
B_PAD = 8        # f32 sublane count
F_IN_PAD = 128   # lane-dense
H_PAD = 128
F_OUT_PAD = 128


# ----------------------------------------------------------------------------
# Pallas kernel: T fused applications of _InnerNetworkModule.forward.
# ----------------------------------------------------------------------------
def _inner_net_kernel(x_ref, rec_ref,
                      w1x_ref, w1r_ref, b1_ref,
                      w2_ref, b2_ref,
                      wo_ref, bo_ref,
                      out_ref, new_rec_ref):
    n_steps = x_ref.shape[0]

    # ---- Hoisted input projection (layer1's 'input' slice of the 'stack') ----
    # One big matmul over all T steps: 8x better MXU row utilization than a
    # per-step 8-row matmul; b1 is folded in here once (no per-step broadcast).
    x_flat = x_ref[...].reshape(n_steps * B_PAD, F_IN_PAD)
    x_proj = (jnp.dot(x_flat.astype(jnp.bfloat16), w1x_ref[...],
                      preferred_element_type=jnp.float32)
              + b1_ref[...])                              # (T*B_PAD, H_PAD) f32
    x_proj = x_proj.reshape(n_steps, B_PAD, H_PAD)

    # Hoist weight loads and the b2 broadcast out of the recurrence.
    w1r = w1r_ref[...]                                    # (H_PAD, H_PAD) bf16
    w2 = w2_ref[...]                                      # (H_PAD, H_PAD) bf16
    b2 = jnp.broadcast_to(b2_ref[...], (B_PAD, H_PAD))    # broadcast once

    rec = rec_ref[...]                                    # (B_PAD, H_PAD) f32
    s_steps = []
    # Static Python unroll over T (T is small and static): only the two
    # rec-dependent K=128 matmuls per step sit on the serial critical path.
    for t in range(n_steps):
        # layer1: inputs ['input', 'rec'], mode 'stack'
        #   tanh(cat([x_t, rec], -1) @ W1 + b1) == tanh(x_proj[t] + rec @ w1r)
        h1 = jnp.tanh(
            x_proj[t]
            + jnp.dot(rec.astype(jnp.bfloat16), w1r,
                      preferred_element_type=jnp.float32))   # (B_PAD, H_PAD)

        # layer2: single input ['layer1']
        h2 = jnp.tanh(
            jnp.dot(h1.astype(jnp.bfloat16), w2,
                    preferred_element_type=jnp.float32) + b2)  # (B_PAD, H_PAD)

        # 'output' layer's 'sum' input; its projection is deferred past the loop.
        s_steps.append(h1 + h2)
        rec = h2   # new_recurrent_outputs['rec'] = layer2 result.squeeze(0)

    new_rec_ref[...] = rec.astype(new_rec_ref.dtype)

    # ---- Hoisted output projection: (h1+h2) @ Wo + bo for all steps at once ----
    s_flat = jnp.stack(s_steps, axis=0).reshape(n_steps * B_PAD, H_PAD)
    out = (jnp.dot(s_flat.astype(jnp.bfloat16), wo_ref[...],
                   preferred_element_type=jnp.float32)
           + bo_ref[...])                                  # (T*B_PAD, F_OUT_PAD)
    out_ref[...] = out.reshape(n_steps, B_PAD, F_OUT_PAD).astype(out_ref.dtype)


# ----------------------------------------------------------------------------
# Wrapper: pad to lane/sublane-dense shapes, run one fused pallas_call, slice.
# ----------------------------------------------------------------------------
@jax.jit
def inner_network_forward(x_seq, rec, padded_params):
    """T fused forward steps of the synthetic _InnerNetworkModule.

    Args:
      x_seq:         (T, B, F_IN)  float32  -- per-step inputs
      rec:           (B, H)        float32  -- recurrent_outputs['rec'] at t=0
      padded_params: dict of lane-padded weights/biases (see pad_params)
    Returns:
      (out_seq, new_rec):  out_seq (T, B, F_OUT), new_rec (B, H)
    """
    t_steps = x_seq.shape[0]

    x_pad = jnp.zeros((t_steps, B_PAD, F_IN_PAD), jnp.float32)
    x_pad = x_pad.at[:, :B, :F_IN].set(x_seq)
    rec_pad = jnp.zeros((B_PAD, H_PAD), jnp.float32)
    rec_pad = rec_pad.at[:B, :H].set(rec)

    # Advisory cost estimate so XLA schedules the pad/slice ops around us.
    flops = (2 * t_steps * B_PAD * F_IN_PAD * H_PAD          # hoisted input proj
             + 2 * t_steps * B_PAD * H_PAD * H_PAD * 2       # rec + layer2 per step
             + 2 * t_steps * B_PAD * H_PAD * F_OUT_PAD)      # hoisted output proj
    transcendentals = 2 * t_steps * B_PAD * H_PAD            # two tanh per step
    bytes_accessed = (4 * (t_steps * B_PAD * F_IN_PAD        # x (f32)
                           + t_steps * B_PAD * F_OUT_PAD     # out (f32)
                           + 2 * B_PAD * H_PAD               # rec in/out (f32)
                           + 3 * H_PAD)                      # biases (f32)
                      + 2 * (F_IN_PAD * H_PAD + 2 * H_PAD * H_PAD
                             + H_PAD * F_OUT_PAD))           # bf16 weights

    vmem = pl.BlockSpec(memory_space=pltpu.MemorySpace.VMEM)
    out_pad, new_rec_pad = pl.pallas_call(
        _inner_net_kernel,
        out_shape=(
            jax.ShapeDtypeStruct((t_steps, B_PAD, F_OUT_PAD), jnp.float32),
            jax.ShapeDtypeStruct((B_PAD, H_PAD), jnp.float32),
        ),
        in_specs=[vmem] * 9,
        out_specs=(vmem, vmem),
        input_output_aliases={1: 1},   # rec_pad buffer reused for new_rec
        cost_estimate=pl.CostEstimate(flops=flops,
                                      transcendentals=transcendentals,
                                      bytes_accessed=bytes_accessed),
    )(x_pad, rec_pad,
      padded_params["w1x"], padded_params["w1r"], padded_params["b1"],
      padded_params["w2"], padded_params["b2"],
      padded_params["wo"], padded_params["bo"])

    return out_pad[:, :B, :F_OUT], new_rec_pad[:B, :H]


def pad_params(p):
    """Zero-pad logical weights to lane-dense kernel layouts (exact math).

    Weights are stored in bfloat16 (MXU-native); biases stay float32 since
    they are only touched by VPU adds.
    """
    w1x = jnp.zeros((F_IN_PAD, H_PAD), jnp.float32).at[:F_IN, :H].set(p["w1a"])
    w1r = jnp.zeros((H_PAD, H_PAD), jnp.float32).at[:H, :H].set(p["w1b"])
    w2 = jnp.zeros((H_PAD, H_PAD), jnp.float32).at[:H, :H].set(p["w2"])
    wo = jnp.zeros((H_PAD, F_OUT_PAD), jnp.float32).at[:H, :F_OUT].set(p["wo"])
    b1 = jnp.zeros((1, H_PAD), jnp.float32).at[:, :H].set(p["b1"])
    b2 = jnp.zeros((1, H_PAD), jnp.float32).at[:, :H].set(p["b2"])
    bo = jnp.zeros((1, F_OUT_PAD), jnp.float32).at[:, :F_OUT].set(p["bo"])
    return {"w1x": w1x.astype(jnp.bfloat16),
            "w1r": w1r.astype(jnp.bfloat16),
            "w2": w2.astype(jnp.bfloat16),
            "wo": wo.astype(jnp.bfloat16),
            "b1": b1, "b2": b2, "bo": bo}


# ----------------------------------------------------------------------------
# Pure-JAX reference that literally mirrors _InnerNetworkModule.forward
# (dict walk, stack/sum input modes), applied step by step over the sequence.
# ----------------------------------------------------------------------------
def reference_forward_step(inp, hidden_rec, params):
    order = ["layer1", "layer2", "output"]
    inputs = {"layer1": ["input", "rec"], "layer2": ["layer1"],
              "output": ["layer1", "layer2"]}
    input_modes = {"layer1": "stack", "layer2": None, "output": "sum"}
    recurrent_layers = {"rec": "layer2"}

    w1 = jnp.concatenate([params["w1a"], params["w1b"]], axis=0)

    def layer1(x, h):  # x: (1, B, F_IN + H)
        return jnp.tanh(x @ w1 + params["b1"]), h

    def layer2(x, h):
        return jnp.tanh(x @ params["w2"] + params["b2"]), h

    def output(x, h):
        return x @ params["wo"] + params["bo"], h

    layers = {"layer1": layer1, "layer2": layer2, "output": output}

    state = {k: () for k in layers}
    recurrent_outputs = {"rec": hidden_rec}

    new_state = {}
    results = {"input": inp,
               **{k: v[None] for k, v in recurrent_outputs.items()}}
    for layer_name in order:
        if len(inputs[layer_name]) > 1:
            ins = [results[p].reshape(results[p].shape[:2] + (-1,))
                   for p in inputs[layer_name]]
            if input_modes[layer_name] == "stack":
                x = jnp.concatenate(ins, axis=-1)
            elif input_modes[layer_name] == "sum":
                x = sum(ins)
            else:
                x = ins
        else:
            x = results[inputs[layer_name][0]]
        results[layer_name], new_state[layer_name] = layers[layer_name](
            x, state[layer_name])
    new_recurrent_outputs = {ph: results[ln][0]
                             for ph, ln in recurrent_layers.items()}
    return results["output"], (new_state, new_recurrent_outputs)


def reference_forward_seq(x_seq, rec0, params):
    outs = []
    rec = rec0
    for t in range(x_seq.shape[0]):
        out_t, (_, new_rec) = reference_forward_step(x_seq[t:t + 1], rec, params)
        outs.append(out_t[0])
        rec = new_rec["rec"]
    return jnp.stack(outs, axis=0), rec


def init_params(key):
    ks = jax.random.split(key, 6)
    scale = 0.1
    return {
        "w1a": scale * jax.random.normal(ks[0], (F_IN, H), jnp.float32),
        "w1b": scale * jax.random.normal(ks[1], (H, H), jnp.float32),
        "b1": scale * jax.random.normal(ks[2], (1, H), jnp.float32),
        "w2": scale * jax.random.normal(ks[3], (H, H), jnp.float32),
        "b2": scale * jax.random.normal(ks[4], (1, H), jnp.float32),
        "wo": scale * jax.random.normal(ks[5], (H, F_OUT), jnp.float32),
        "bo": jnp.zeros((1, F_OUT), jnp.float32),
    }


if __name__ == "__main__":
    key = jax.random.PRNGKey(0)
    k_inp, k_params = jax.random.split(key)

    params = init_params(k_params)
    padded_params = pad_params(params)

    x_seq = jax.random.normal(k_inp, (T, B, F_IN), jnp.float32)

    # get_initial_state: recurrent output starts at zeros (get_initial_output)
    rec0 = jnp.zeros((B, H), jnp.float32)

    # One fused kernel call covers all T recurrent steps.
    out_seq, rec_T = inner_network_forward(x_seq, rec0, padded_params)
    jax.block_until_ready((out_seq, rec_T))

    # Verify against a literal re-implementation of the PyTorch forward,
    # threaded step by step through the 'rec' placeholder (f32 reference;
    # kernel uses bf16 matmul inputs, so tolerance is relaxed accordingly).
    ref_out_seq, ref_rec_T = reference_forward_seq(x_seq, rec0, params)
    assert jnp.allclose(out_seq, ref_out_seq, atol=2e-2, rtol=2e-2), \
        "fused sequence output mismatch"
    assert jnp.allclose(rec_T, ref_rec_T, atol=2e-2, rtol=2e-2), \
        "final recurrent state mismatch"

    print("KERNEL_OK")
</pallas_src>

<mosaic_0001>
module attributes {stable_mosaic.version = 11 : i64} {
  func.func @_inner_net_kernel(%arg0: memref<8x8x128xf32, #tpu.memory_space<vmem>>, %arg1: memref<8x128xf32, #tpu.memory_space<vmem>>, %arg2: memref<128x128xbf16, #tpu.memory_space<vmem>>, %arg3: memref<128x128xbf16, #tpu.memory_space<vmem>>, %arg4: memref<1x128xf32, #tpu.memory_space<vmem>>, %arg5: memref<128x128xbf16, #tpu.memory_space<vmem>>, %arg6: memref<1x128xf32, #tpu.memory_space<vmem>>, %arg7: memref<128x128xbf16, #tpu.memory_space<vmem>>, %arg8: memref<1x128xf32, #tpu.memory_space<vmem>>, %arg9: memref<8x8x128xf32, #tpu.memory_space<vmem>>, %arg10: memref<8x128xf32, #tpu.memory_space<vmem>>) attributes {dimension_semantics = [], scalar_prefetch = 0 : i64, scratch_operands = 0 : i64, tpu.core_type = #tpu.core_type<tc>} {
    %c0 = arith.constant 0 : index
    %c0_0 = arith.constant 0 : index
    %c0_1 = arith.constant 0 : index
    %0 = vector.load %arg0[%c0, %c0_0, %c0_1] : memref<8x8x128xf32, #tpu.memory_space<vmem>>, vector<8x8x128xf32>
    %1 = vector.shape_cast %0 : vector<8x8x128xf32> to vector<64x128xf32>
    %2 = arith.truncf %1 : vector<64x128xf32> to vector<64x128xbf16>
    %c0_2 = arith.constant 0 : index
    %c0_3 = arith.constant 0 : index
    %3 = vector.load %arg2[%c0_2, %c0_3] : memref<128x128xbf16, #tpu.memory_space<vmem>>, vector<128x128xbf16>
    %cst = arith.constant dense<0.000000e+00> : vector<64x128xf32>
    %4 = tpu.matmul %2, %3, %cst {dimension_numbers = #tpu.dot_dimension_numbers<[1], [0], [0], [1], [0, 0, 1, 1], [], []>} : vector<64x128xbf16>, vector<128x128xbf16>, vector<64x128xf32> -> vector<64x128xf32>
    %c0_4 = arith.constant 0 : index
    %c0_5 = arith.constant 0 : index
    %5 = vector.load %arg4[%c0_4, %c0_5] : memref<1x128xf32, #tpu.memory_space<vmem>>, vector<1x128xf32>
    %6 = vector.broadcast %5 : vector<1x128xf32> to vector<64x128xf32>
    %7 = arith.addf %4, %6 : vector<64x128xf32>
    %8 = vector.shape_cast %7 : vector<64x128xf32> to vector<8x8x128xf32>
    %c0_6 = arith.constant 0 : index
    %c0_7 = arith.constant 0 : index
    %9 = vector.load %arg3[%c0_6, %c0_7] : memref<128x128xbf16, #tpu.memory_space<vmem>>, vector<128x128xbf16>
    %c0_8 = arith.constant 0 : index
    %c0_9 = arith.constant 0 : index
    %10 = vector.load %arg5[%c0_8, %c0_9] : memref<128x128xbf16, #tpu.memory_space<vmem>>, vector<128x128xbf16>
    %c0_10 = arith.constant 0 : index
    %c0_11 = arith.constant 0 : index
    %11 = vector.load %arg6[%c0_10, %c0_11] : memref<1x128xf32, #tpu.memory_space<vmem>>, vector<1x128xf32>
    %12 = vector.shape_cast %11 : vector<1x128xf32> to vector<1x128xf32>
    %13 = vector.broadcast %12 : vector<1x128xf32> to vector<8x128xf32>
    %c0_12 = arith.constant 0 : index
    %c0_13 = arith.constant 0 : index
    %14 = vector.load %arg1[%c0_12, %c0_13] : memref<8x128xf32, #tpu.memory_space<vmem>>, vector<8x128xf32>
    %15 = vector.extract_strided_slice %8 {offsets = [0, 0, 0], sizes = [1, 8, 128], strides = [1, 1, 1]} : vector<8x8x128xf32> to vector<1x8x128xf32>
    %16 = vector.shape_cast %15 : vector<1x8x128xf32> to vector<8x128xf32>
    %17 = arith.truncf %14 : vector<8x128xf32> to vector<8x128xbf16>
    %cst_14 = arith.constant dense<0.000000e+00> : vector<8x128xf32>
    %18 = tpu.matmul %17, %9, %cst_14 {dimension_numbers = #tpu.dot_dimension_numbers<[1], [0], [0], [1], [0, 0, 1, 1], [], []>} : vector<8x128xbf16>, vector<128x128xbf16>, vector<8x128xf32> -> vector<8x128xf32>
    %19 = arith.addf %16, %18 : vector<8x128xf32>
    %20 = math.tanh %19 : vector<8x128xf32>
    %21 = arith.truncf %20 : vector<8x128xf32> to vector<8x128xbf16>
    %cst_15 = arith.constant dense<0.000000e+00> : vector<8x128xf32>
    %22 = tpu.matmul %21, %10, %cst_15 {dimension_numbers = #tpu.dot_dimension_numbers<[1], [0], [0], [1], [0, 0, 1, 1], [], []>} : vector<8x128xbf16>, vector<128x128xbf16>, vector<8x128xf32> -> vector<8x128xf32>
    %23 = arith.addf %22, %13 : vector<8x128xf32>
    %24 = math.tanh %23 : vector<8x128xf32>
    %25 = arith.addf %20, %24 : vector<8x128xf32>
    %26 = vector.extract_strided_slice %8 {offsets = [1, 0, 0], sizes = [1, 8, 128], strides = [1, 1, 1]} : vector<8x8x128xf32> to vector<1x8x128xf32>
    %27 = vector.shape_cast %26 : vector<1x8x128xf32> to vector<8x128xf32>
    %28 = arith.truncf %24 : vector<8x128xf32> to vector<8x128xbf16>
    %cst_16 = arith.constant dense<0.000000e+00> : vector<8x128xf32>
    %29 = tpu.matmul %28, %9, %cst_16 {dimension_numbers = #tpu.dot_dimension_numbers<[1], [0], [0], [1], [0, 0, 1, 1], [], []>} : vector<8x128xbf16>, vector<128x128xbf16>, vector<8x128xf32> -> vector<8x128xf32>
    %30 = arith.addf %27, %29 : vector<8x128xf32>
    %31 = math.tanh %30 : vector<8x128xf32>
    %32 = arith.truncf %31 : vector<8x128xf32> to vector<8x128xbf16>
    %cst_17 = arith.constant dense<0.000000e+00> : vector<8x128xf32>
    %33 = tpu.matmul %32, %10, %cst_17 {dimension_numbers = #tpu.dot_dimension_numbers<[1], [0], [0], [1], [0, 0, 1, 1], [], []>} : vector<8x128xbf16>, vector<128x128xbf16>, vector<8x128xf32> -> vector<8x128xf32>
    %34 = arith.addf %33, %13 : vector<8x128xf32>
    %35 = math.tanh %34 : vector<8x128xf32>
    %36 = arith.addf %31, %35 : vector<8x128xf32>
    %37 = vector.extract_strided_slice %8 {offsets = [2, 0, 0], sizes = [1, 8, 128], strides = [1, 1, 1]} : vector<8x8x128xf32> to vector<1x8x128xf32>
    %38 = vector.shape_cast %37 : vector<1x8x128xf32> to vector<8x128xf32>
    %39 = arith.truncf %35 : vector<8x128xf32> to vector<8x128xbf16>
    %cst_18 = arith.constant dense<0.000000e+00> : vector<8x128xf32>
    %40 = tpu.matmul %39, %9, %cst_18 {dimension_numbers = #tpu.dot_dimension_numbers<[1], [0], [0], [1], [0, 0, 1, 1], [], []>} : vector<8x128xbf16>, vector<128x128xbf16>, vector<8x128xf32> -> vector<8x128xf32>
    %41 = arith.addf %38, %40 : vector<8x128xf32>
    %42 = math.tanh %41 : vector<8x128xf32>
    %43 = arith.truncf %42 : vector<8x128xf32> to vector<8x128xbf16>
    %cst_19 = arith.constant dense<0.000000e+00> : vector<8x128xf32>
    %44 = tpu.matmul %43, %10, %cst_19 {dimension_numbers = #tpu.dot_dimension_numbers<[1], [0], [0], [1], [0, 0, 1, 1], [], []>} : vector<8x128xbf16>, vector<128x128xbf16>, vector<8x128xf32> -> vector<8x128xf32>
    %45 = arith.addf %44, %13 : vector<8x128xf32>
    %46 = math.tanh %45 : vector<8x128xf32>
    %47 = arith.addf %42, %46 : vector<8x128xf32>
    %48 = vector.extract_strided_slice %8 {offsets = [3, 0, 0], sizes = [1, 8, 128], strides = [1, 1, 1]} : vector<8x8x128xf32> to vector<1x8x128xf32>
    %49 = vector.shape_cast %48 : vector<1x8x128xf32> to vector<8x128xf32>
    %50 = arith.truncf %46 : vector<8x128xf32> to vector<8x128xbf16>
    %cst_20 = arith.constant dense<0.000000e+00> : vector<8x128xf32>
    %51 = tpu.matmul %50, %9, %cst_20 {dimension_numbers = #tpu.dot_dimension_numbers<[1], [0], [0], [1], [0, 0, 1, 1], [], []>} : vector<8x128xbf16>, vector<128x128xbf16>, vector<8x128xf32> -> vector<8x128xf32>
    %52 = arith.addf %49, %51 : vector<8x128xf32>
    %53 = math.tanh %52 : vector<8x128xf32>
    %54 = arith.truncf %53 : vector<8x128xf32> to vector<8x128xbf16>
    %cst_21 = arith.constant dense<0.000000e+00> : vector<8x128xf32>
    %55 = tpu.matmul %54, %10, %cst_21 {dimension_numbers = #tpu.dot_dimension_numbers<[1], [0], [0], [1], [0, 0, 1, 1], [], []>} : vector<8x128xbf16>, vector<128x128xbf16>, vector<8x128xf32> -> vector<8x128xf32>
    %56 = arith.addf %55, %13 : vector<8x128xf32>
    %57 = math.tanh %56 : vector<8x128xf32>
    %58 = arith.addf %53, %57 : vector<8x128xf32>
    %59 = vector.extract_strided_slice %8 {offsets = [4, 0, 0], sizes = [1, 8, 128], strides = [1, 1, 1]} : vector<8x8x128xf32> to vector<1x8x128xf32>
    %60 = vector.shape_cast %59 : vector<1x8x128xf32> to vector<8x128xf32>
    %61 = arith.truncf %57 : vector<8x128xf32> to vector<8x128xbf16>
    %cst_22 = arith.constant dense<0.000000e+00> : vector<8x128xf32>
    %62 = tpu.matmul %61, %9, %cst_22 {dimension_numbers = #tpu.dot_dimension_numbers<[1], [0], [0], [1], [0, 0, 1, 1], [], []>} : vector<8x128xbf16>, vector<128x128xbf16>, vector<8x128xf32> -> vector<8x128xf32>
    %63 = arith.addf %60, %62 : vector<8x128xf32>
    %64 = math.tanh %63 : vector<8x128xf32>
    %65 = arith.truncf %64 : vector<8x128xf32> to vector<8x128xbf16>
    %cst_23 = arith.constant dense<0.000000e+00> : vector<8x128xf32>
    %66 = tpu.matmul %65, %10, %cst_23 {dimension_numbers = #tpu.dot_dimension_numbers<[1], [0], [0], [1], [0, 0, 1, 1], [], []>} : vector<8x128xbf16>, vector<128x128xbf16>, vector<8x128xf32> -> vector<8x128xf32>
    %67 = arith.addf %66, %13 : vector<8x128xf32>
    %68 = math.tanh %67 : vector<8x128xf32>
    %69 = arith.addf %64, %68 : vector<8x128xf32>
    %70 = vector.extract_strided_slice %8 {offsets = [5, 0, 0], sizes = [1, 8, 128], strides = [1, 1, 1]} : vector<8x8x128xf32> to vector<1x8x128xf32>
    %71 = vector.shape_cast %70 : vector<1x8x128xf32> to vector<8x128xf32>
    %72 = arith.truncf %68 : vector<8x128xf32> to vector<8x128xbf16>
    %cst_24 = arith.constant dense<0.000000e+00> : vector<8x128xf32>
    %73 = tpu.matmul %72, %9, %cst_24 {dimension_numbers = #tpu.dot_dimension_numbers<[1], [0], [0], [1], [0, 0, 1, 1], [], []>} : vector<8x128xbf16>, vector<128x128xbf16>, vector<8x128xf32> -> vector<8x128xf32>
    %74 = arith.addf %71, %73 : vector<8x128xf32>
    %75 = math.tanh %74 : vector<8x128xf32>
    %76 = arith.truncf %75 : vector<8x128xf32> to vector<8x128xbf16>
    %cst_25 = arith.constant dense<0.000000e+00> : vector<8x128xf32>
    %77 = tpu.matmul %76, %10, %cst_25 {dimension_numbers = #tpu.dot_dimension_numbers<[1], [0], [0], [1], [0, 0, 1, 1], [], []>} : vector<8x128xbf16>, vector<128x128xbf16>, vector<8x128xf32> -> vector<8x128xf32>
    %78 = arith.addf %77, %13 : vector<8x128xf32>
    %79 = math.tanh %78 : vector<8x128xf32>
    %80 = arith.addf %75, %79 : vector<8x128xf32>
    %81 = vector.extract_strided_slice %8 {offsets = [6, 0, 0], sizes = [1, 8, 128], strides = [1, 1, 1]} : vector<8x8x128xf32> to vector<1x8x128xf32>
    %82 = vector.shape_cast %81 : vector<1x8x128xf32> to vector<8x128xf32>
    %83 = arith.truncf %79 : vector<8x128xf32> to vector<8x128xbf16>
    %cst_26 = arith.constant dense<0.000000e+00> : vector<8x128xf32>
    %84 = tpu.matmul %83, %9, %cst_26 {dimension_numbers = #tpu.dot_dimension_numbers<[1], [0], [0], [1], [0, 0, 1, 1], [], []>} : vector<8x128xbf16>, vector<128x128xbf16>, vector<8x128xf32> -> vector<8x128xf32>
    %85 = arith.addf %82, %84 : vector<8x128xf32>
    %86 = math.tanh %85 : vector<8x128xf32>
    %87 = arith.truncf %86 : vector<8x128xf32> to vector<8x128xbf16>
    %cst_27 = arith.constant dense<0.000000e+00> : vector<8x128xf32>
    %88 = tpu.matmul %87, %10, %cst_27 {dimension_numbers = #tpu.dot_dimension_numbers<[1], [0], [0], [1], [0, 0, 1, 1], [], []>} : vector<8x128xbf16>, vector<128x128xbf16>, vector<8x128xf32> -> vector<8x128xf32>
    %89 = arith.addf %88, %13 : vector<8x128xf32>
    %90 = math.tanh %89 : vector<8x128xf32>
    %91 = arith.addf %86, %90 : vector<8x128xf32>
    %92 = vector.extract_strided_slice %8 {offsets = [7, 0, 0], sizes = [1, 8, 128], strides = [1, 1, 1]} : vector<8x8x128xf32> to vector<1x8x128xf32>
    %93 = vector.shape_cast %92 : vector<1x8x128xf32> to vector<8x128xf32>
    %94 = arith.truncf %90 : vector<8x128xf32> to vector<8x128xbf16>
    %cst_28 = arith.constant dense<0.000000e+00> : vector<8x128xf32>
    %95 = tpu.matmul %94, %9, %cst_28 {dimension_numbers = #tpu.dot_dimension_numbers<[1], [0], [0], [1], [0, 0, 1, 1], [], []>} : vector<8x128xbf16>, vector<128x128xbf16>, vector<8x128xf32> -> vector<8x128xf32>
    %96 = arith.addf %93, %95 : vector<8x128xf32>
    %97 = math.tanh %96 : vector<8x128xf32>
    %98 = arith.truncf %97 : vector<8x128xf32> to vector<8x128xbf16>
    %cst_29 = arith.constant dense<0.000000e+00> : vector<8x128xf32>
    %99 = tpu.matmul %98, %10, %cst_29 {dimension_numbers = #tpu.dot_dimension_numbers<[1], [0], [0], [1], [0, 0, 1, 1], [], []>} : vector<8x128xbf16>, vector<128x128xbf16>, vector<8x128xf32> -> vector<8x128xf32>
    %100 = arith.addf %99, %13 : vector<8x128xf32>
    %101 = math.tanh %100 : vector<8x128xf32>
    %102 = arith.addf %97, %101 : vector<8x128xf32>
    %c0_30 = arith.constant 0 : index
    %c0_31 = arith.constant 0 : index
    %103 = vector.load %arg10[%c0_30, %c0_31] : memref<8x128xf32, #tpu.memory_space<vmem>>, vector<8x128xf32>
    tpu.vector_store %arg10[%c0_30, %c0_31], %101 {strides = array<i32>} : memref<8x128xf32, #tpu.memory_space<vmem>>, vector<8x128xf32>,
    %104 = vector.shape_cast %25 : vector<8x128xf32> to vector<1x8x128xf32>
    %105 = vector.shape_cast %36 : vector<8x128xf32> to vector<1x8x128xf32>
    %106 = vector.shape_cast %47 : vector<8x128xf32> to vector<1x8x128xf32>
    %107 = vector.shape_cast %58 : vector<8x128xf32> to vector<1x8x128xf32>
    %108 = vector.shape_cast %69 : vector<8x128xf32> to vector<1x8x128xf32>
    %109 = vector.shape_cast %80 : vector<8x128xf32> to vector<1x8x128xf32>
    %110 = vector.shape_cast %91 : vector<8x128xf32> to vector<1x8x128xf32>
    %111 = vector.shape_cast %102 : vector<8x128xf32> to vector<1x8x128xf32>
    %112 = tpu.concatenate %104, %105, %106, %107, %108, %109, %110, %111 in 0 : vector<1x8x128xf32>, vector<1x8x128xf32>, vector<1x8x128xf32>, vector<1x8x128xf32>, vector<1x8x128xf32>, vector<1x8x128xf32>, vector<1x8x128xf32>, vector<1x8x128xf32> -> vector<8x8x128xf32>
    %113 = vector.shape_cast %112 : vector<8x8x128xf32> to vector<64x128xf32>
    %114 = arith.truncf %113 : vector<64x128xf32> to vector<64x128xbf16>
    %c0_32 = arith.constant 0 : index
    %c0_33 = arith.constant 0 : index
    %115 = vector.load %arg7[%c0_32, %c0_33] : memref<128x128xbf16, #tpu.memory_space<vmem>>, vector<128x128xbf16>
    %cst_34 = arith.constant dense<0.000000e+00> : vector<64x128xf32>
    %116 = tpu.matmul %114, %115, %cst_34 {dimension_numbers = #tpu.dot_dimension_numbers<[1], [0], [0], [1], [0, 0, 1, 1], [], []>} : vector<64x128xbf16>, vector<128x128xbf16>, vector<64x128xf32> -> vector<64x128xf32>
    %c0_35 = arith.constant 0 : index
    %c0_36 = arith.constant 0 : index
    %117 = vector.load %arg8[%c0_35, %c0_36] : memref<1x128xf32, #tpu.memory_space<vmem>>, vector<1x128xf32>
    %118 = vector.broadcast %117 : vector<1x128xf32> to vector<64x128xf32>
    %119 = arith.addf %116, %118 : vector<64x128xf32>
    %120 = vector.shape_cast %119 : vector<64x128xf32> to vector<8x8x128xf32>
    %c0_37 = arith.constant 0 : index
    %c0_38 = arith.constant 0 : index
    %c0_39 = arith.constant 0 : index
    %121 = vector.load %arg9[%c0_37, %c0_38, %c0_39] : memref<8x8x128xf32, #tpu.memory_space<vmem>>, vector<8x8x128xf32>
    tpu.vector_store %arg9[%c0_37, %c0_38, %c0_39], %120 {strides = array<i32>} : memref<8x8x128xf32, #tpu.memory_space<vmem>>, vector<8x8x128xf32>,
    return
  }
}

</mosaic_0001>

<llo_original>
// kernel: inner_network_forward.1
$region0: #{inner_network_forward.1}
  #allocation0 [shape = 'u32[]', space=smem, size = 0x4, offset = 0x4, fixed_abs, tag = 'smem constant byte address 0x4 - core index']
  #allocation1 [shape = 'u32[144,128]{1,0:T(1,128)}', space=vmem, size = 0x12000, scoped, tag = 'internal scratch']
  %s0 = inlined_call_operand.vmem [shape: f32[8,8,128], index: 0, kind: input, shape index: {}]
  %s1 = inlined_call_operand.vmem [shape: f32[8,128], index: 1, kind: input, shape index: {}, may-alias: {1,10}]
  %s2 = inlined_call_operand.vmem [shape: bf16[128,128], index: 2, kind: input, shape index: {}]
  %s3 = inlined_call_operand.hbm [shape: bf16[128,128], index: 3, kind: input, shape index: {}]
  %s4 = inlined_call_operand.vmem [shape: f32[1,128], index: 4, kind: input, shape index: {}]
  %s5 = inlined_call_operand.hbm [shape: bf16[128,128], index: 5, kind: input, shape index: {}]
  %s6 = inlined_call_operand.vmem [shape: f32[1,128], index: 6, kind: input, shape index: {}]
  %s7 = inlined_call_operand.hbm [shape: bf16[128,128], index: 7, kind: input, shape index: {}]
  %s8 = inlined_call_operand.vmem [shape: f32[1,128], index: 8, kind: input, shape index: {}]
  %s9 = inlined_call_operand.vmem [shape: f32[8,8,128], index: 9, kind: output, shape index: {0}]
  %s10 = inlined_call_operand.vmem [shape: f32[8,128], index: 10, kind: output, shape index: {1}, may-alias: {1,10}]
  %11 = xla_tuple %s9, %s10
  %s12 = sld [smem:[#allocation0]]
  $region66: #{inner_network_forward.1} parent=0
    _
  %s14 = ssub.s32 1, %s12
  %s15 = scalar_select 0, %s14, %s12
  $region1: #{inner_network_forward.1} parent=0
    #allocation2 [shape = 'u8[32768]{0}', space=vmem, size = 0x8000, scoped, tag = 'input window, operand 3, single buffered']
    #allocation3 [shape = 's32[1]{0}', space=sflag, size = 0x4, scoped, tag = 'scoped memory for inner_network_forward.1']
    #allocation4 [shape = 'u8[32768]{0}', space=vmem, size = 0x8000, scoped, tag = 'input window, operand 5, single buffered']
    #allocation5 [shape = 's32[1]{0}', space=sflag, size = 0x4, scoped, tag = 'scoped memory for inner_network_forward.1']
    #allocation6 [shape = 'u8[32768]{0}', space=vmem, size = 0x8000, scoped, tag = 'input window, operand 7, single buffered']
    %16 = vsyncpa [#allocation3], 0
    %17 = vsyncpa [#allocation5], 0
    // Predicated region
    $region2: #{inner_network_forward.1} parent=1 // pred_check
      _
    $region3: #{inner_network_forward.1} parent=1 // pred_check_branch
      %19 = sbr.rel (0) target = $region5
    $region4: #{inner_network_forward.1} parent=1 // pred_region
      _
    $region5: #{inner_network_forward.1} parent=1 // pred_fallthru
      _
    // Predicated region
    $region6: #{inner_network_forward.1} parent=1 // pred_check
      _
    $region7: #{inner_network_forward.1} parent=1 // pred_check_branch
      %21 = sbr.rel (0) target = $region9
    $region8: #{inner_network_forward.1} parent=1 // pred_region
      _
    $region9: #{inner_network_forward.1} parent=1 // pred_fallthru
      _
    // Predicated region
    $region10: #{inner_network_forward.1} parent=1 // pred_check
      _
    $region11: #{inner_network_forward.1} parent=1 // pred_check_branch
      %23 = sbr.rel (0) target = $region13
    $region12: #{inner_network_forward.1} parent=1 // pred_region
      _
    $region13: #{inner_network_forward.1} parent=1 // pred_fallthru
      _
    // Predicated region
    $region14: #{inner_network_forward.1} parent=1 // pred_check
      _
    $region15: #{inner_network_forward.1} parent=1 // pred_check_branch
      %25 = sbr.rel (0) target = $region17
    $region16: #{inner_network_forward.1} parent=1 // pred_region
      %s27 = ssub.s32 1024, 1024
      %28 = vsyncadd [#allocation3], %s27
      %s29 = sshll.u32 [#allocation2], 4
      %s30 = int_to_ptr.vmem [resolvable:$true] %s29
      %35 = dma.hbm_to_vmem [thread:$0]  %s3, 1024, %s30, [#allocation3], 64, 64, 4
    $region17: #{inner_network_forward.1} parent=1 // pred_fallthru
      _
    // Predicated region
    $region18: #{inner_network_forward.1} parent=1 // pred_check
      _
    $region19: #{inner_network_forward.1} parent=1 // pred_check_branch
      %37 = sbr.rel (0) target = $region21
    $region20: #{inner_network_forward.1} parent=1 // pred_region
      _
    $region21: #{inner_network_forward.1} parent=1 // pred_fallthru
      _
    // Predicated region
    $region22: #{inner_network_forward.1} parent=1 // pred_check
      _
    $region23: #{inner_network_forward.1} parent=1 // pred_check_branch
      %39 = sbr.rel (0) target = $region25
    $region24: #{inner_network_forward.1} parent=1 // pred_region
      %s41 = ssub.s32 1024, 1024
      %42 = vsyncadd [#allocation5], %s41
      %s43 = sshll.u32 [#allocation4], 4
      %s44 = int_to_ptr.vmem [resolvable:$true] %s43
      %49 = dma.hbm_to_vmem [thread:$0]  %s5, 1024, %s44, [#allocation5], 64, 64, 4
    $region25: #{inner_network_forward.1} parent=1 // pred_fallthru
      _
    // Predicated region
    $region26: #{inner_network_forward.1} parent=1 // pred_check
      _
    $region27: #{inner_network_forward.1} parent=1 // pred_check_branch
      %51 = sbr.rel (0) target = $region29
    $region28: #{inner_network_forward.1} parent=1 // pred_region
      _
    $region29: #{inner_network_forward.1} parent=1 // pred_fallthru
      _
    // Predicated region
    $region30: #{inner_network_forward.1} parent=1 // pred_check
      _
    $region31: #{inner_network_forward.1} parent=1 // pred_check_branch
      %53 = sbr.rel (0) target = $region33
    $region32: #{inner_network_forward.1} parent=1 // pred_region
      %s55 = ssub.s32 1024, 1024
      %56 = vsyncadd [#allocation5], %s55
      %s57 = sshll.u32 [#allocation6], 4
      %s58 = int_to_ptr.vmem [resolvable:$true] %s57
      %63 = dma.hbm_to_vmem [thread:$0]  %s7, 1024, %s58, [#allocation5], 64, 64, 4
    $region33: #{inner_network_forward.1} parent=1 // pred_fallthru
      _
    // Predicated region
    $region34: #{inner_network_forward.1} parent=1 // pred_check
      _
    $region35: #{inner_network_forward.1} parent=1 // pred_check_branch
      %65 = sbr.rel (0) target = $region37
    $region36: #{inner_network_forward.1} parent=1 // pred_region
      _
    $region37: #{inner_network_forward.1} parent=1 // pred_fallthru
      _
    // Predicated region
    $region38: #{inner_network_forward.1} parent=1 // pred_check
      _
    $region39: #{inner_network_forward.1} parent=1 // pred_check_branch
      %67 = sbr.rel (0) target = $region41
    $region40: #{inner_network_forward.1} parent=1 // pred_region
      %68 = dma.done [#allocation3], 1024
    $region41: #{inner_network_forward.1} parent=1 // pred_fallthru
      _
    // Predicated region
    $region42: #{inner_network_forward.1} parent=1 // pred_check
      _
    $region43: #{inner_network_forward.1} parent=1 // pred_check_branch
      %70 = sbr.rel (0) target = $region45
    $region44: #{inner_network_forward.1} parent=1 // pred_region
      %71 = dma.done [#allocation5], 1024
    $region45: #{inner_network_forward.1} parent=1 // pred_fallthru
      _
    // Predicated region
    $region46: #{inner_network_forward.1} parent=1 // pred_check
      _
    $region47: #{inner_network_forward.1} parent=1 // pred_check_branch
      %73 = sbr.rel (0) target = $region49
    $region48: #{inner_network_forward.1} parent=1 // pred_region
      %74 = dma.done [#allocation5], 1024
    $region49: #{inner_network_forward.1} parent=1 // pred_fallthru
      _
    %v76 = vld [vmem:[%s0] sm:$0xff]
    %v77 = vld [vmem:[%s0 + $0x8] sm:$0xff]
    %v78 = vld [vmem:[%s0 + $0x10] sm:$0xff]
    %v79 = vld [vmem:[%s0 + $0x18] sm:$0xff]
    %v80 = vld [vmem:[%s0 + $0x20] sm:$0xff]
    %v81 = vld [vmem:[%s0 + $0x28] sm:$0xff]
    %v82 = vld [vmem:[%s0 + $0x30] sm:$0xff]
    %v83 = vld [vmem:[%s0 + $0x38] sm:$0xff]
    %v84 = vpack.c.bf16 %v77, %v76
    %v85 = vpack.c.bf16 %v79, %v78
    %v86 = vpack.c.bf16 %v81, %v80
    %v87 = vpack.c.bf16 %v83, %v82
    %v88 = vld [vmem:[%s2] sm:$0xf]
    %v89 = vld [vmem:[%s2 + $0x4] sm:$0xf]
    %v90 = vld [vmem:[%s2 + $0x8] sm:$0xf]
    %v91 = vld [vmem:[%s2 + $0xc] sm:$0xf]
    %v92 = vld [vmem:[%s2 + $0x10] sm:$0xf]
    %v93 = vld [vmem:[%s2 + $0x14] sm:$0xf]
    %v94 = vld [vmem:[%s2 + $0x18] sm:$0xf]
    %v95 = vld [vmem:[%s2 + $0x1c] sm:$0xf]
    %v96 = vld [vmem:[%s2 + $0x20] sm:$0xf]
    %v97 = vld [vmem:[%s2 + $0x24] sm:$0xf]
    %v98 = vld [vmem:[%s2 + $0x28] sm:$0xf]
    %v99 = vld [vmem:[%s2 + $0x2c] sm:$0xf]
    %v100 = vld [vmem:[%s2 + $0x30] sm:$0xf]
    %v101 = vld [vmem:[%s2 + $0x34] sm:$0xf]
    %v102 = vld [vmem:[%s2 + $0x38] sm:$0xf]
    %v103 = vld [vmem:[%s2 + $0x3c] sm:$0xf]
    %v104 = vld [vmem:[%s4] sm:$0x1]
    %v106 = vlaneseq
    %v107 = vshrl.u32 %v106, 7
    %v108 = vsub.s32 0, %v107
    %v109 = vrot.slane %v104, %v108
    %v127 = vunpack.c.l.b16 %v88
    %v128 = vunpack.c.l.b16 %v89
    %v129 = vunpack.c.l.b16 %v90
    %v130 = vunpack.c.l.b16 %v91
    %v131 = vunpack.c.l.b16 %v92
    %v132 = vunpack.c.l.b16 %v93
    %v133 = vunpack.c.l.b16 %v94
    %v134 = vunpack.c.l.b16 %v95
    %v135 = vunpack.c.l.b16 %v96
    %v136 = vunpack.c.l.b16 %v97
    %v137 = vunpack.c.l.b16 %v98
    %v138 = vunpack.c.l.b16 %v99
    %v139 = vunpack.c.l.b16 %v100
    %v140 = vunpack.c.l.b16 %v101
    %v141 = vunpack.c.l.b16 %v102
    %v142 = vunpack.c.l.b16 %v103
    %v143 = vpack.c.b16 %v128, %v127
    %v144 = vpack.c.b16 %v130, %v129
    %v145 = vpack.c.b16 %v132, %v131
    %v146 = vpack.c.b16 %v134, %v133
    %v147 = vpack.c.b16 %v136, %v135
    %v148 = vpack.c.b16 %v138, %v137
    %v149 = vpack.c.b16 %v140, %v139
    %v150 = vpack.c.b16 %v142, %v141
    %159 = vmatprep.subr.bf16.mxu0 0
    %160 = vmatpush1.bf16.msra.mxu0 %v143
    %161 = vmatprep.subr.bf16.mxu0 0
    %162 = vmatpush1.bf16.msra.mxu0 %v144
    %163 = vmatprep.subr.bf16.mxu0 0
    %164 = vmatpush1.bf16.msra.mxu0 %v145
    %165 = vmatprep.subr.bf16.mxu0 0
    %166 = vmatpush1.bf16.msra.mxu0 %v146
    %167 = vmatprep.subr.bf16.mxu0 0
    %168 = vmatpush1.bf16.msra.mxu0 %v147
    %169 = vmatprep.subr.bf16.mxu0 0
    %170 = vmatpush1.bf16.msra.mxu0 %v148
    %171 = vmatprep.subr.bf16.mxu0 0
    %172 = vmatpush1.bf16.msra.mxu0 %v149
    %173 = vmatprep.subr.bf16.mxu0 0
    %174 = vmatpush1.bf16.msra.mxu0 %v150
    %175 = vmatprep.subr.bf16.mxu0 0
    %176 = vmatpush1.bf16.msra.mxu0 0
    %177 = vmatprep.subr.bf16.mxu0 0
    %178 = vmatpush1.bf16.msra.mxu0 0
    %179 = vmatprep.subr.bf16.mxu0 0
    %180 = vmatpush1.bf16.msra.mxu0 0
    %181 = vmatprep.subr.bf16.mxu0 0
    %182 = vmatpush1.bf16.msra.mxu0 0
    %183 = vmatprep.subr.bf16.mxu0 0
    %184 = vmatpush1.bf16.msra.mxu0 0
    %185 = vmatprep.subr.bf16.mxu0 0
    %186 = vmatpush1.bf16.msra.mxu0 0
    %187 = vmatprep.subr.bf16.mxu0 0
    %188 = vmatpush1.bf16.msra.mxu0 0
    %189 = vmatprep.subr.bf16.mxu0 0
    %190 = vmatpush1.bf16.msra.mxu0 0
    %191 = vmatprep.mubr.bf16.mxu0 0
    %192 = vmatmul.mubr.bf16.gmra.mrb[0].mxu0 %v84
    %v193 = vpop.f32.mrb[0].mxu0
    %v194 = vadd.f32 %v109, %v193
    %v195 = vpop.f32.mrb[0].mxu0
    %v196 = vpop.f32.mrb[0].mxu0
    %v197 = vadd.f32 %v109, %v196
    %v198 = vpop.f32.mrb[0].mxu0
    %199 = vmatprep.mubr.bf16.mxu0 0
    %200 = vmatmul.mubr.bf16.gmra.mrb[0].mxu0 %v85
    %v201 = vpop.f32.mrb[0].mxu0
    %v202 = vadd.f32 %v109, %v201
    %v203 = vpop.f32.mrb[0].mxu0
    %v204 = vpop.f32.mrb[0].mxu0
    %v205 = vadd.f32 %v109, %v204
    %v206 = vpop.f32.mrb[0].mxu0
    %207 = vmatprep.mubr.bf16.mxu0 0
    %208 = vmatmul.mubr.bf16.gmra.mrb[0].mxu0 %v86
    %v209 = vpop.f32.mrb[0].mxu0
    %v210 = vadd.f32 %v109, %v209
    %v211 = vpop.f32.mrb[0].mxu0
    %v212 = vpop.f32.mrb[0].mxu0
    %v213 = vadd.f32 %v109, %v212
    %v214 = vpop.f32.mrb[0].mxu0
    %215 = vmatprep.mubr.bf16.mxu0 0
    %216 = vmatmul.mubr.bf16.gmra.mrb[0].mxu0 %v87
    %v217 = vpop.f32.mrb[0].mxu0
    %v218 = vadd.f32 %v109, %v217
    %v219 = vpop.f32.mrb[0].mxu0
    %v220 = vpop.f32.mrb[0].mxu0
    %v221 = vadd.f32 %v109, %v220
    %v222 = vpop.f32.mrb[0].mxu0
    %223 = vdwg.mxu0
    %v224 = vld [vmem:[#allocation2] sm:$0xf]
    %v225 = vld [vmem:[#allocation2 + $0x4] sm:$0xf]
    %v226 = vld [vmem:[#allocation2 + $0x8] sm:$0xf]
    %v227 = vld [vmem:[#allocation2 + $0xc] sm:$0xf]
    %v228 = vld [vmem:[#allocation2 + $0x10] sm:$0xf]
    %v229 = vld [vmem:[#allocation2 + $0x14] sm:$0xf]
    %v230 = vld [vmem:[#allocation2 + $0x18] sm:$0xf]
    %v231 = vld [vmem:[#allocation2 + $0x1c] sm:$0xf]
    %v232 = vld [vmem:[#allocation2 + $0x20] sm:$0xf]
    %v233 = vld [vmem:[#allocation2 + $0x24] sm:$0xf]
    %v234 = vld [vmem:[#allocation2 + $0x28] sm:$0xf]
    %v235 = vld [vmem:[#allocation2 + $0x2c] sm:$0xf]
    %v236 = vld [vmem:[#allocation2 + $0x30] sm:$0xf]
    %v237 = vld [vmem:[#allocation2 + $0x34] sm:$0xf]
    %v238 = vld [vmem:[#allocation2 + $0x38] sm:$0xf]
    %v239 = vld [vmem:[#allocation2 + $0x3c] sm:$0xf]
    %v240 = vld [vmem:[#allocation4] sm:$0xf]
    %v241 = vld [vmem:[#allocation4 + $0x4] sm:$0xf]
    %v242 = vld [vmem:[#allocation4 + $0x8] sm:$0xf]
    %v243 = vld [vmem:[#allocation4 + $0xc] sm:$0xf]
    %v244 = vld [vmem:[#allocation4 + $0x10] sm:$0xf]
    %v245 = vld [vmem:[#allocation4 + $0x14] sm:$0xf]
    %v246 = vld [vmem:[#allocation4 + $0x18] sm:$0xf]
    %v247 = vld [vmem:[#allocation4 + $0x1c] sm:$0xf]
    %v248 = vld [vmem:[#allocation4 + $0x20] sm:$0xf]
    %v249 = vld [vmem:[#allocation4 + $0x24] sm:$0xf]
    %v250 = vld [vmem:[#allocation4 + $0x28] sm:$0xf]
    %v251 = vld [vmem:[#allocation4 + $0x2c] sm:$0xf]
    %v252 = vld [vmem:[#allocation4 + $0x30] sm:$0xf]
    %v253 = vld [vmem:[#allocation4 + $0x34] sm:$0xf]
    %v254 = vld [vmem:[#allocation4 + $0x38] sm:$0xf]
    %v255 = vld [vmem:[#allocation4 + $0x3c] sm:$0xf]
    %v256 = vld [vmem:[%s6] sm:$0x1]
    %v258 = vlaneseq
    %v259 = vshrl.u32 %v258, 7
    %v260 = vsub.s32 0, %v259
    %v261 = vrot.slane %v256, %v260
    %v263 = vld [vmem:[%s1] sm:$0xff]
    %v264 = vpack.c.bf16 %v263, %v263
    %v281 = vunpack.c.l.b16 %v224
    %v282 = vunpack.c.l.b16 %v225
    %v283 = vunpack.c.l.b16 %v226
    %v284 = vunpack.c.l.b16 %v227
    %v285 = vunpack.c.l.b16 %v228
    %v286 = vunpack.c.l.b16 %v229
    %v287 = vunpack.c.l.b16 %v230
    %v288 = vunpack.c.l.b16 %v231
    %v289 = vunpack.c.l.b16 %v232
    %v290 = vunpack.c.l.b16 %v233
    %v291 = vunpack.c.l.b16 %v234
    %v292 = vunpack.c.l.b16 %v235
    %v293 = vunpack.c.l.b16 %v236
    %v294 = vunpack.c.l.b16 %v237
    %v295 = vunpack.c.l.b16 %v238
    %v296 = vunpack.c.l.b16 %v239
    %v297 = vpack.c.b16 %v282, %v281
    %v298 = vpack.c.b16 %v284, %v283
    %v299 = vpack.c.b16 %v286, %v285
    %v300 = vpack.c.b16 %v288, %v287
    %v301 = vpack.c.b16 %v290, %v289
    %v302 = vpack.c.b16 %v292, %v291
    %v303 = vpack.c.b16 %v294, %v293
    %v304 = vpack.c.b16 %v296, %v295
    %313 = vmatprep.subr.bf16.mxu0 0
    %314 = vmatpush1.bf16.msra.mxu0 %v297
    %315 = vmatprep.subr.bf16.mxu0 0
    %316 = vmatpush1.bf16.msra.mxu0 %v298
    %317 = vmatprep.subr.bf16.mxu0 0
    %318 = vmatpush1.bf16.msra.mxu0 %v299
    %319 = vmatprep.subr.bf16.mxu0 0
    %320 = vmatpush1.bf16.msra.mxu0 %v300
    %321 = vmatprep.subr.bf16.mxu0 0
    %322 = vmatpush1.bf16.msra.mxu0 %v301
    %323 = vmatprep.subr.bf16.mxu0 0
    %324 = vmatpush1.bf16.msra.mxu0 %v302
    %325 = vmatprep.subr.bf16.mxu0 0
    %326 = vmatpush1.bf16.msra.mxu0 %v303
    %327 = vmatprep.subr.bf16.mxu0 0
    %328 = vmatpush1.bf16.msra.mxu0 %v304
    %329 = vmatprep.subr.bf16.mxu0 0
    %330 = vmatpush1.bf16.msra.mxu0 0
    %331 = vmatprep.subr.bf16.mxu0 0
    %332 = vmatpush1.bf16.msra.mxu0 0
    %333 = vmatprep.subr.bf16.mxu0 0
    %334 = vmatpush1.bf16.msra.mxu0 0
    %335 = vmatprep.subr.bf16.mxu0 0
    %336 = vmatpush1.bf16.msra.mxu0 0
    %337 = vmatprep.subr.bf16.mxu0 0
    %338 = vmatpush1.bf16.msra.mxu0 0
    %339 = vmatprep.subr.bf16.mxu0 0
    %340 = vmatpush1.bf16.msra.mxu0 0
    %341 = vmatprep.subr.bf16.mxu0 0
    %342 = vmatpush1.bf16.msra.mxu0 0
    %343 = vmatprep.subr.bf16.mxu0 0
    %344 = vmatpush1.bf16.msra.mxu0 0
    %345 = vmatprep.mubr.bf16.mxu0 0
    %346 = vmatmul.mubr.bf16.gmra.mrb[0].mxu0 %v264
    %v347 = vpop.f32.mrb[0].mxu0
    %v348 = vadd.f32 0.0, %v347
    %v349 = vpop.f32.mrb[0].mxu0
    %v350 = vpop.f32.mrb[0].mxu0
    %v351 = vpop.f32.mrb[0].mxu0
    %352 = vdwg.mxu0
    %v353 = vadd.f32 %v194, %v348
    %v354 = vtanh.pop %v353
    %v355 = vpack.c.bf16 %v354, %v354
    %v372 = vunpack.c.l.b16 %v240
    %v373 = vunpack.c.l.b16 %v241
    %v374 = vunpack.c.l.b16 %v242
    %v375 = vunpack.c.l.b16 %v243
    %v376 = vunpack.c.l.b16 %v244
    %v377 = vunpack.c.l.b16 %v245
    %v378 = vunpack.c.l.b16 %v246
    %v379 = vunpack.c.l.b16 %v247
    %v380 = vunpack.c.l.b16 %v248
    %v381 = vunpack.c.l.b16 %v249
    %v382 = vunpack.c.l.b16 %v250
    %v383 = vunpack.c.l.b16 %v251
    %v384 = vunpack.c.l.b16 %v252
    %v385 = vunpack.c.l.b16 %v253
    %v386 = vunpack.c.l.b16 %v254
    %v387 = vunpack.c.l.b16 %v255
    %v388 = vpack.c.b16 %v373, %v372
    %v389 = vpack.c.b16 %v375, %v374
    %v390 = vpack.c.b16 %v377, %v376
    %v391 = vpack.c.b16 %v379, %v378
    %v392 = vpack.c.b16 %v381, %v380
    %v393 = vpack.c.b16 %v383, %v382
    %v394 = vpack.c.b16 %v385, %v384
    %v395 = vpack.c.b16 %v387, %v386
    %404 = vmatprep.subr.bf16.mxu0 0
    %405 = vmatpush1.bf16.msra.mxu0 %v388
    %406 = vmatprep.subr.bf16.mxu0 0
    %407 = vmatpush1.bf16.msra.mxu0 %v389
    %408 = vmatprep.subr.bf16.mxu0 0
    %409 = vmatpush1.bf16.msra.mxu0 %v390
    %410 = vmatprep.subr.bf16.mxu0 0
    %411 = vmatpush1.bf16.msra.mxu0 %v391
    %412 = vmatprep.subr.bf16.mxu0 0
    %413 = vmatpush1.bf16.msra.mxu0 %v392
    %414 = vmatprep.subr.bf16.mxu0 0
    %415 = vmatpush1.bf16.msra.mxu0 %v393
    %416 = vmatprep.subr.bf16.mxu0 0
    %417 = vmatpush1.bf16.msra.mxu0 %v394
    %418 = vmatprep.subr.bf16.mxu0 0
    %419 = vmatpush1.bf16.msra.mxu0 %v395
    %420 = vmatprep.subr.bf16.mxu0 0
    %421 = vmatpush1.bf16.msra.mxu0 0
    %422 = vmatprep.subr.bf16.mxu0 0
    %423 = vmatpush1.bf16.msra.mxu0 0
    %424 = vmatprep.subr.bf16.mxu0 0
    %425 = vmatpush1.bf16.msra.mxu0 0
    %426 = vmatprep.subr.bf16.mxu0 0
    %427 = vmatpush1.bf16.msra.mxu0 0
    %428 = vmatprep.subr.bf16.mxu0 0
    %429 = vmatpush1.bf16.msra.mxu0 0
    %430 = vmatprep.subr.bf16.mxu0 0
    %431 = vmatpush1.bf16.msra.mxu0 0
    %432 = vmatprep.subr.bf16.mxu0 0
    %433 = vmatpush1.bf16.msra.mxu0 0
    %434 = vmatprep.subr.bf16.mxu0 0
    %435 = vmatpush1.bf16.msra.mxu0 0
    %436 = vmatprep.mubr.bf16.mxu0 0
    %437 = vmatmul.mubr.bf16.gmra.mrb[0].mxu0 %v355
    %v438 = vpop.f32.mrb[0].mxu0
    %v439 = vadd.f32 %v261, %v438
    %v440 = vpop.f32.mrb[0].mxu0
    %v441 = vpop.f32.mrb[0].mxu0
    %v442 = vpop.f32.mrb[0].mxu0
    %443 = vdwg.mxu0
    %v444 = vtanh.pop %v439
    %v445 = vadd.f32 %v354, %v444
    %v446 = vpack.c.bf16 %v444, %v444
    %447 = vmatprep.subr.bf16.mxu0 0
    %448 = vmatpush1.bf16.msra.mxu0 %v297
    %449 = vmatprep.subr.bf16.mxu0 0
    %450 = vmatpush1.bf16.msra.mxu0 %v298
    %451 = vmatprep.subr.bf16.mxu0 0
    %452 = vmatpush1.bf16.msra.mxu0 %v299
    %453 = vmatprep.subr.bf16.mxu0 0
    %454 = vmatpush1.bf16.msra.mxu0 %v300
    %455 = vmatprep.subr.bf16.mxu0 0
    %456 = vmatpush1.bf16.msra.mxu0 %v301
    %457 = vmatprep.subr.bf16.mxu0 0
    %458 = vmatpush1.bf16.msra.mxu0 %v302
    %459 = vmatprep.subr.bf16.mxu0 0
    %460 = vmatpush1.bf16.msra.mxu0 %v303
    %461 = vmatprep.subr.bf16.mxu0 0
    %462 = vmatpush1.bf16.msra.mxu0 %v304
    %463 = vmatprep.subr.bf16.mxu0 0
    %464 = vmatpush1.bf16.msra.mxu0 0
    %465 = vmatprep.subr.bf16.mxu0 0
    %466 = vmatpush1.bf16.msra.mxu0 0
    %467 = vmatprep.subr.bf16.mxu0 0
    %468 = vmatpush1.bf16.msra.mxu0 0
    %469 = vmatprep.subr.bf16.mxu0 0
    %470 = vmatpush1.bf16.msra.mxu0 0
    %471 = vmatprep.subr.bf16.mxu0 0
    %472 = vmatpush1.bf16.msra.mxu0 0
    %473 = vmatprep.subr.bf16.mxu0 0
    %474 = vmatpush1.bf16.msra.mxu0 0
    %475 = vmatprep.subr.bf16.mxu0 0
    %476 = vmatpush1.bf16.msra.mxu0 0
    %477 = vmatprep.subr.bf16.mxu0 0
    %478 = vmatpush1.bf16.msra.mxu0 0
    %479 = vmatprep.mubr.bf16.mxu0 0
    %480 = vmatmul.mubr.bf16.gmra.mrb[0].mxu0 %v446
    %v481 = vpop.f32.mrb[0].mxu0
    %v482 = vadd.f32 0.0, %v481
    %v483 = vpop.f32.mrb[0].mxu0
    %v484 = vpop.f32.mrb[0].mxu0
    %v485 = vpop.f32.mrb[0].mxu0
    %486 = vdwg.mxu0
    %v487 = vadd.f32 %v197, %v482
    %v488 = vtanh.pop %v487
    %v489 = vpack.c.bf16 %v488, %v488
    %490 = vmatprep.subr.bf16.mxu0 0
    %491 = vmatpush1.bf16.msra.mxu0 %v388
    %492 = vmatprep.subr.bf16.mxu0 0
    %493 = vmatpush1.bf16.msra.mxu0 %v389
    %494 = vmatprep.subr.bf16.mxu0 0
    %495 = vmatpush1.bf16.msra.mxu0 %v390
    %496 = vmatprep.subr.bf16.mxu0 0
    %497 = vmatpush1.bf16.msra.mxu0 %v391
    %498 = vmatprep.subr.bf16.mxu0 0
    %499 = vmatpush1.bf16.msra.mxu0 %v392
    %500 = vmatprep.subr.bf16.mxu0 0
    %501 = vmatpush1.bf16.msra.mxu0 %v393
    %502 = vmatprep.subr.bf16.mxu0 0
    %503 = vmatpush1.bf16.msra.mxu0 %v394
    %504 = vmatprep.subr.bf16.mxu0 0
    %505 = vmatpush1.bf16.msra.mxu0 %v395
    %506 = vmatprep.subr.bf16.mxu0 0
    %507 = vmatpush1.bf16.msra.mxu0 0
    %508 = vmatprep.subr.bf16.mxu0 0
    %509 = vmatpush1.bf16.msra.mxu0 0
    %510 = vmatprep.subr.bf16.mxu0 0
    %511 = vmatpush1.bf16.msra.mxu0 0
    %512 = vmatprep.subr.bf16.mxu0 0
    %513 = vmatpush1.bf16.msra.mxu0 0
    %514 = vmatprep.subr.bf16.mxu0 0
    %515 = vmatpush1.bf16.msra.mxu0 0
    %516 = vmatprep.subr.bf16.mxu0 0
    %517 = vmatpush1.bf16.msra.mxu0 0
    %518 = vmatprep.subr.bf16.mxu0 0
    %519 = vmatpush1.bf16.msra.mxu0 0
    %520 = vmatprep.subr.bf16.mxu0 0
    %521 = vmatpush1.bf16.msra.mxu0 0
    %522 = vmatprep.mubr.bf16.mxu0 0
    %523 = vmatmul.mubr.bf16.gmra.mrb[0].mxu0 %v489
    %v524 = vpop.f32.mrb[0].mxu0
    %v525 = vadd.f32 %v261, %v524
    %v526 = vpop.f32.mrb[0].mxu0
    %v527 = vpop.f32.mrb[0].mxu0
    %v528 = vpop.f32.mrb[0].mxu0
    %529 = vdwg.mxu0
    %v530 = vtanh.pop %v525
    %v531 = vadd.f32 %v488, %v530
    %v532 = vpack.c.bf16 %v530, %v530
    %533 = vmatprep.subr.bf16.mxu0 0
    %534 = vmatpush1.bf16.msra.mxu0 %v297
    %535 = vmatprep.subr.bf16.mxu0 0
    %536 = vmatpush1.bf16.msra.mxu0 %v298
    %537 = vmatprep.subr.bf16.mxu0 0
    %538 = vmatpush1.bf16.msra.mxu0 %v299
    %539 = vmatprep.subr.bf16.mxu0 0
    %540 = vmatpush1.bf16.msra.mxu0 %v300
    %541 = vmatprep.subr.bf16.mxu0 0
    %542 = vmatpush1.bf16.msra.mxu0 %v301
    %543 = vmatprep.subr.bf16.mxu0 0
    %544 = vmatpush1.bf16.msra.mxu0 %v302
    %545 = vmatprep.subr.bf16.mxu0 0
    %546 = vmatpush1.bf16.msra.mxu0 %v303
    %547 = vmatprep.subr.bf16.mxu0 0
    %548 = vmatpush1.bf16.msra.mxu0 %v304
    %549 = vmatprep.subr.bf16.mxu0 0
    %550 = vmatpush1.bf16.msra.mxu0 0
    %551 = vmatprep.subr.bf16.mxu0 0
    %552 = vmatpush1.bf16.msra.mxu0 0
    %553 = vmatprep.subr.bf16.mxu0 0
    %554 = vmatpush1.bf16.msra.mxu0 0
    %555 = vmatprep.subr.bf16.mxu0 0
    %556 = vmatpush1.bf16.msra.mxu0 0
    %557 = vmatprep.subr.bf16.mxu0 0
    %558 = vmatpush1.bf16.msra.mxu0 0
    %559 = vmatprep.subr.bf16.mxu0 0
    %560 = vmatpush1.bf16.msra.mxu0 0
    %561 = vmatprep.subr.bf16.mxu0 0
    %562 = vmatpush1.bf16.msra.mxu0 0
    %563 = vmatprep.subr.bf16.mxu0 0
    %564 = vmatpush1.bf16.msra.mxu0 0
    %565 = vmatprep.mubr.bf16.mxu0 0
    %566 = vmatmul.mubr.bf16.gmra.mrb[0].mxu0 %v532
    %v567 = vpop.f32.mrb[0].mxu0
    %v568 = vadd.f32 0.0, %v567
    %v569 = vpop.f32.mrb[0].mxu0
    %v570 = vpop.f32.mrb[0].mxu0
    %v571 = vpop.f32.mrb[0].mxu0
    %572 = vdwg.mxu0
    %v573 = vadd.f32 %v202, %v568
    %v574 = vtanh.pop %v573
    %v575 = vpack.c.bf16 %v574, %v574
    %576 = vmatprep.subr.bf16.mxu0 0
    %577 = vmatpush1.bf16.msra.mxu0 %v388
    %578 = vmatprep.subr.bf16.mxu0 0
    %579 = vmatpush1.bf16.msra.mxu0 %v389
    %580 = vmatprep.subr.bf16.mxu0 0
    %581 = vmatpush1.bf16.msra.mxu0 %v390
    %582 = vmatprep.subr.bf16.mxu0 0
    %583 = vmatpush1.bf16.msra.mxu0 %v391
    %584 = vmatprep.subr.bf16.mxu0 0
    %585 = vmatpush1.bf16.msra.mxu0 %v392
    %586 = vmatprep.subr.bf16.mxu0 0
    %587 = vmatpush1.bf16.msra.mxu0 %v393
    %588 = vmatprep.subr.bf16.mxu0 0
    %589 = vmatpush1.bf16.msra.mxu0 %v394
    %590 = vmatprep.subr.bf16.mxu0 0
    %591 = vmatpush1.bf16.msra.mxu0 %v395
    %592 = vmatprep.subr.bf16.mxu0 0
    %593 = vmatpush1.bf16.msra.mxu0 0
    %594 = vmatprep.subr.bf16.mxu0 0
    %595 = vmatpush1.bf16.msra.mxu0 0
    %596 = vmatprep.subr.bf16.mxu0 0
    %597 = vmatpush1.bf16.msra.mxu0 0
    %598 = vmatprep.subr.bf16.mxu0 0
    %599 = vmatpush1.bf16.msra.mxu0 0
    %600 = vmatprep.subr.bf16.mxu0 0
    %601 = vmatpush1.bf16.msra.mxu0 0
    %602 = vmatprep.subr.bf16.mxu0 0
    %603 = vmatpush1.bf16.msra.mxu0 0
    %604 = vmatprep.subr.bf16.mxu0 0
    %605 = vmatpush1.bf16.msra.mxu0 0
    %606 = vmatprep.subr.bf16.mxu0 0
    %607 = vmatpush1.bf16.msra.mxu0 0
    %608 = vmatprep.mubr.bf16.mxu0 0
    %609 = vmatmul.mubr.bf16.gmra.mrb[0].mxu0 %v575
    %v610 = vpop.f32.mrb[0].mxu0
    %v611 = vadd.f32 %v261, %v610
    %v612 = vpop.f32.mrb[0].mxu0
    %v613 = vpop.f32.mrb[0].mxu0
    %v614 = vpop.f32.mrb[0].mxu0
    %615 = vdwg.mxu0
    %v616 = vtanh.pop %v611
    %v617 = vadd.f32 %v574, %v616
    %v618 = vpack.c.bf16 %v616, %v616
    %619 = vmatprep.subr.bf16.mxu0 0
    %620 = vmatpush1.bf16.msra.mxu0 %v297
    %621 = vmatprep.subr.bf16.mxu0 0
    %622 = vmatpush1.bf16.msra.mxu0 %v298
    %623 = vmatprep.subr.bf16.mxu0 0
    %624 = vmatpush1.bf16.msra.mxu0 %v299
    %625 = vmatprep.subr.bf16.mxu0 0
    %626 = vmatpush1.bf16.msra.mxu0 %v300
    %627 = vmatprep.subr.bf16.mxu0 0
    %628 = vmatpush1.bf16.msra.mxu0 %v301
    %629 = vmatprep.subr.bf16.mxu0 0
    %630 = vmatpush1.bf16.msra.mxu0 %v302
    %631 = vmatprep.subr.bf16.mxu0 0
    %632 = vmatpush1.bf16.msra.mxu0 %v303
    %633 = vmatprep.subr.bf16.mxu0 0
    %634 = vmatpush1.bf16.msra.mxu0 %v304
    %635 = vmatprep.subr.bf16.mxu0 0
    %636 = vmatpush1.bf16.msra.mxu0 0
    %637 = vmatprep.subr.bf16.mxu0 0
    %638 = vmatpush1.bf16.msra.mxu0 0
    %639 = vmatprep.subr.bf16.mxu0 0
    %640 = vmatpush1.bf16.msra.mxu0 0
    %641 = vmatprep.subr.bf16.mxu0 0
    %642 = vmatpush1.bf16.msra.mxu0 0
    %643 = vmatprep.subr.bf16.mxu0 0
    %644 = vmatpush1.bf16.msra.mxu0 0
    %645 = vmatprep.subr.bf16.mxu0 0
    %646 = vmatpush1.bf16.msra.mxu0 0
    %647 = vmatprep.subr.bf16.mxu0 0
    %648 = vmatpush1.bf16.msra.mxu0 0
    %649 = vmatprep.subr.bf16.mxu0 0
    %650 = vmatpush1.bf16.msra.mxu0 0
    %651 = vmatprep.mubr.bf16.mxu0 0
    %652 = vmatmul.mubr.bf16.gmra.mrb[0].mxu0 %v618
    %v653 = vpop.f32.mrb[0].mxu0
    %v654 = vadd.f32 0.0, %v653
    %v655 = vpop.f32.mrb[0].mxu0
    %v656 = vpop.f32.mrb[0].mxu0
    %v657 = vpop.f32.mrb[0].mxu0
    %658 = vdwg.mxu0
    %v659 = vadd.f32 %v205, %v654
    %v660 = vtanh.pop %v659
    %v661 = vpack.c.bf16 %v660, %v660
    %662 = vmatprep.subr.bf16.mxu0 0
    %663 = vmatpush1.bf16.msra.mxu0 %v388
    %664 = vmatprep.subr.bf16.mxu0 0
    %665 = vmatpush1.bf16.msra.mxu0 %v389
    %666 = vmatprep.subr.bf16.mxu0 0
    %667 = vmatpush1.bf16.msra.mxu0 %v390
    %668 = vmatprep.subr.bf16.mxu0 0
    %669 = vmatpush1.bf16.msra.mxu0 %v391
    %670 = vmatprep.subr.bf16.mxu0 0
    %671 = vmatpush1.bf16.msra.mxu0 %v392
    %672 = vmatprep.subr.bf16.mxu0 0
    %673 = vmatpush1.bf16.msra.mxu0 %v393
    %674 = vmatprep.subr.bf16.mxu0 0
    %675 = vmatpush1.bf16.msra.mxu0 %v394
    %676 = vmatprep.subr.bf16.mxu0 0
    %677 = vmatpush1.bf16.msra.mxu0 %v395
    %678 = vmatprep.subr.bf16.mxu0 0
    %679 = vmatpush1.bf16.msra.mxu0 0
    %680 = vmatprep.subr.bf16.mxu0 0
    %681 = vmatpush1.bf16.msra.mxu0 0
    %682 = vmatprep.subr.bf16.mxu0 0
    %683 = vmatpush1.bf16.msra.mxu0 0
    %684 = vmatprep.subr.bf16.mxu0 0
    %685 = vmatpush1.bf16.msra.mxu0 0
    %686 = vmatprep.subr.bf16.mxu0 0
    %687 = vmatpush1.bf16.msra.mxu0 0
    %688 = vmatprep.subr.bf16.mxu0 0
    %689 = vmatpush1.bf16.msra.mxu0 0
    %690 = vmatprep.subr.bf16.mxu0 0
    %691 = vmatpush1.bf16.msra.mxu0 0
    %692 = vmatprep.subr.bf16.mxu0 0
    %693 = vmatpush1.bf16.msra.mxu0 0
    %694 = vmatprep.mubr.bf16.mxu0 0
    %695 = vmatmul.mubr.bf16.gmra.mrb[0].mxu0 %v661
    %v696 = vpop.f32.mrb[0].mxu0
    %v697 = vadd.f32 %v261, %v696
    %v698 = vpop.f32.mrb[0].mxu0
    %v699 = vpop.f32.mrb[0].mxu0
    %v700 = vpop.f32.mrb[0].mxu0
    %701 = vdwg.mxu0
    %v702 = vtanh.pop %v697
    %v703 = vadd.f32 %v660, %v702
    %v704 = vpack.c.bf16 %v702, %v702
    %705 = vmatprep.subr.bf16.mxu0 0
    %706 = vmatpush1.bf16.msra.mxu0 %v297
    %707 = vmatprep.subr.bf16.mxu0 0
    %708 = vmatpush1.bf16.msra.mxu0 %v298
    %709 = vmatprep.subr.bf16.mxu0 0
    %710 = vmatpush1.bf16.msra.mxu0 %v299
    %711 = vmatprep.subr.bf16.mxu0 0
    %712 = vmatpush1.bf16.msra.mxu0 %v300
    %713 = vmatprep.subr.bf16.mxu0 0
    %714 = vmatpush1.bf16.msra.mxu0 %v301
    %715 = vmatprep.subr.bf16.mxu0 0
    %716 = vmatpush1.bf16.msra.mxu0 %v302
    %717 = vmatprep.subr.bf16.mxu0 0
    %718 = vmatpush1.bf16.msra.mxu0 %v303
    %719 = vmatprep.subr.bf16.mxu0 0
    %720 = vmatpush1.bf16.msra.mxu0 %v304
    %721 = vmatprep.subr.bf16.mxu0 0
    %722 = vmatpush1.bf16.msra.mxu0 0
    %723 = vmatprep.subr.bf16.mxu0 0
    %724 = vmatpush1.bf16.msra.mxu0 0
    %725 = vmatprep.subr.bf16.mxu0 0
    %726 = vmatpush1.bf16.msra.mxu0 0
    %727 = vmatprep.subr.bf16.mxu0 0
    %728 = vmatpush1.bf16.msra.mxu0 0
    %729 = vmatprep.subr.bf16.mxu0 0
    %730 = vmatpush1.bf16.msra.mxu0 0
    %731 = vmatprep.subr.bf16.mxu0 0
    %732 = vmatpush1.bf16.msra.mxu0 0
    %733 = vmatprep.subr.bf16.mxu0 0
    %734 = vmatpush1.bf16.msra.mxu0 0
    %735 = vmatprep.subr.bf16.mxu0 0
    %736 = vmatpush1.bf16.msra.mxu0 0
    %737 = vmatprep.mubr.bf16.mxu0 0
    %738 = vmatmul.mubr.bf16.gmra.mrb[0].mxu0 %v704
    %v739 = vpop.f32.mrb[0].mxu0
    %v740 = vadd.f32 0.0, %v739
    %v741 = vpop.f32.mrb[0].mxu0
    %v742 = vpop.f32.mrb[0].mxu0
    %v743 = vpop.f32.mrb[0].mxu0
    %744 = vdwg.mxu0
    %v745 = vadd.f32 %v210, %v740
    %v746 = vtanh.pop %v745
    %v747 = vpack.c.bf16 %v746, %v746
    %748 = vmatprep.subr.bf16.mxu0 0
    %749 = vmatpush1.bf16.msra.mxu0 %v388
    %750 = vmatprep.subr.bf16.mxu0 0
    %751 = vmatpush1.bf16.msra.mxu0 %v389
    %752 = vmatprep.subr.bf16.mxu0 0
    %753 = vmatpush1.bf16.msra.mxu0 %v390
    %754 = vmatprep.subr.bf16.mxu0 0
    %755 = vmatpush1.bf16.msra.mxu0 %v391
    %756 = vmatprep.subr.bf16.mxu0 0
    %757 = vmatpush1.bf16.msra.mxu0 %v392
    %758 = vmatprep.subr.bf16.mxu0 0
    %759 = vmatpush1.bf16.msra.mxu0 %v393
    %760 = vmatprep.subr.bf16.mxu0 0
    %761 = vmatpush1.bf16.msra.mxu0 %v394
    %762 = vmatprep.subr.bf16.mxu0 0
    %763 = vmatpush1.bf16.msra.mxu0 %v395
    %764 = vmatprep.subr.bf16.mxu0 0
    %765 = vmatpush1.bf16.msra.mxu0 0
    %766 = vmatprep.subr.bf16.mxu0 0
    %767 = vmatpush1.bf16.msra.mxu0 0
    %768 = vmatprep.subr.bf16.mxu0 0
    %769 = vmatpush1.bf16.msra.mxu0 0
    %770 = vmatprep.subr.bf16.mxu0 0
    %771 = vmatpush1.bf16.msra.mxu0 0
    %772 = vmatprep.subr.bf16.mxu0 0
    %773 = vmatpush1.bf16.msra.mxu0 0
    %774 = vmatprep.subr.bf16.mxu0 0
    %775 = vmatpush1.bf16.msra.mxu0 0
    %776 = vmatprep.subr.bf16.mxu0 0
    %777 = vmatpush1.bf16.msra.mxu0 0
    %778 = vmatprep.subr.bf16.mxu0 0
    %779 = vmatpush1.bf16.msra.mxu0 0
    %780 = vmatprep.mubr.bf16.mxu0 0
    %781 = vmatmul.mubr.bf16.gmra.mrb[0].mxu0 %v747
    %v782 = vpop.f32.mrb[0].mxu0
    %v783 = vadd.f32 %v261, %v782
    %v784 = vpop.f32.mrb[0].mxu0
    %v785 = vpop.f32.mrb[0].mxu0
    %v786 = vpop.f32.mrb[0].mxu0
    %787 = vdwg.mxu0
    %v788 = vtanh.pop %v783
    %v789 = vadd.f32 %v746, %v788
    %v790 = vpack.c.bf16 %v788, %v788
    %791 = vmatprep.subr.bf16.mxu0 0
    %792 = vmatpush1.bf16.msra.mxu0 %v297
    %793 = vmatprep.subr.bf16.mxu0 0
    %794 = vmatpush1.bf16.msra.mxu0 %v298
    %795 = vmatprep.subr.bf16.mxu0 0
    %796 = vmatpush1.bf16.msra.mxu0 %v299
    %797 = vmatprep.subr.bf16.mxu0 0
    %798 = vmatpush1.bf16.msra.mxu0 %v300
    %799 = vmatprep.subr.bf16.mxu0 0
    %800 = vmatpush1.bf16.msra.mxu0 %v301
    %801 = vmatprep.subr.bf16.mxu0 0
    %802 = vmatpush1.bf16.msra.mxu0 %v302
    %803 = vmatprep.subr.bf16.mxu0 0
    %804 = vmatpush1.bf16.msra.mxu0 %v303
    %805 = vmatprep.subr.bf16.mxu0 0
    %806 = vmatpush1.bf16.msra.mxu0 %v304
    %807 = vmatprep.subr.bf16.mxu0 0
    %808 = vmatpush1.bf16.msra.mxu0 0
    %809 = vmatprep.subr.bf16.mxu0 0
    %810 = vmatpush1.bf16.msra.mxu0 0
    %811 = vmatprep.subr.bf16.mxu0 0
    %812 = vmatpush1.bf16.msra.mxu0 0
    %813 = vmatprep.subr.bf16.mxu0 0
    %814 = vmatpush1.bf16.msra.mxu0 0
    %815 = vmatprep.subr.bf16.mxu0 0
    %816 = vmatpush1.bf16.msra.mxu0 0
    %817 = vmatprep.subr.bf16.mxu0 0
    %818 = vmatpush1.bf16.msra.mxu0 0
    %819 = vmatprep.subr.bf16.mxu0 0
    %820 = vmatpush1.bf16.msra.mxu0 0
    %821 = vmatprep.subr.bf16.mxu0 0
    %822 = vmatpush1.bf16.msra.mxu0 0
    %823 = vmatprep.mubr.bf16.mxu0 0
    %824 = vmatmul.mubr.bf16.gmra.mrb[0].mxu0 %v790
    %v825 = vpop.f32.mrb[0].mxu0
    %v826 = vadd.f32 0.0, %v825
    %v827 = vpop.f32.mrb[0].mxu0
    %v828 = vpop.f32.mrb[0].mxu0
    %v829 = vpop.f32.mrb[0].mxu0
    %830 = vdwg.mxu0
    %v831 = vadd.f32 %v213, %v826
    %v832 = vtanh.pop %v831
    %v833 = vpack.c.bf16 %v832, %v832
    %834 = vmatprep.subr.bf16.mxu0 0
    %835 = vmatpush1.bf16.msra.mxu0 %v388
    %836 = vmatprep.subr.bf16.mxu0 0
    %837 = vmatpush1.bf16.msra.mxu0 %v389
    %838 = vmatprep.subr.bf16.mxu0 0
    %839 = vmatpush1.bf16.msra.mxu0 %v390
    %840 = vmatprep.subr.bf16.mxu0 0
    %841 = vmatpush1.bf16.msra.mxu0 %v391
    %842 = vmatprep.subr.bf16.mxu0 0
    %843 = vmatpush1.bf16.msra.mxu0 %v392
    %844 = vmatprep.subr.bf16.mxu0 0
    %845 = vmatpush1.bf16.msra.mxu0 %v393
    %846 = vmatprep.subr.bf16.mxu0 0
    %847 = vmatpush1.bf16.msra.mxu0 %v394
    %848 = vmatprep.subr.bf16.mxu0 0
    %849 = vmatpush1.bf16.msra.mxu0 %v395
    %850 = vmatprep.subr.bf16.mxu0 0
    %851 = vmatpush1.bf16.msra.mxu0 0
    %852 = vmatprep.subr.bf16.mxu0 0
    %853 = vmatpush1.bf16.msra.mxu0 0
    %854 = vmatprep.subr.bf16.mxu0 0
    %855 = vmatpush1.bf16.msra.mxu0 0
    %856 = vmatprep.subr.bf16.mxu0 0
    %857 = vmatpush1.bf16.msra.mxu0 0
    %858 = vmatprep.subr.bf16.mxu0 0
    %859 = vmatpush1.bf16.msra.mxu0 0
    %860 = vmatprep.subr.bf16.mxu0 0
    %861 = vmatpush1.bf16.msra.mxu0 0
    %862 = vmatprep.subr.bf16.mxu0 0
    %863 = vmatpush1.bf16.msra.mxu0 0
    %864 = vmatprep.subr.bf16.mxu0 0
    %865 = vmatpush1.bf16.msra.mxu0 0
    %866 = vmatprep.mubr.bf16.mxu0 0
    %867 = vmatmul.mubr.bf16.gmra.mrb[0].mxu0 %v833
    %v868 = vpop.f32.mrb[0].mxu0
    %v869 = vadd.f32 %v261, %v868
    %v870 = vpop.f32.mrb[0].mxu0
    %v871 = vpop.f32.mrb[0].mxu0
    %v872 = vpop.f32.mrb[0].mxu0
    %873 = vdwg.mxu0
    %v874 = vtanh.pop %v869
    %v875 = vadd.f32 %v832, %v874
    %v876 = vpack.c.bf16 %v874, %v874
    %877 = vmatprep.subr.bf16.mxu0 0
    %878 = vmatpush1.bf16.msra.mxu0 %v297
    %879 = vmatprep.subr.bf16.mxu0 0
    %880 = vmatpush1.bf16.msra.mxu0 %v298
    %881 = vmatprep.subr.bf16.mxu0 0
    %882 = vmatpush1.bf16.msra.mxu0 %v299
    %883 = vmatprep.subr.bf16.mxu0 0
    %884 = vmatpush1.bf16.msra.mxu0 %v300
    %885 = vmatprep.subr.bf16.mxu0 0
    %886 = vmatpush1.bf16.msra.mxu0 %v301
    %887 = vmatprep.subr.bf16.mxu0 0
    %888 = vmatpush1.bf16.msra.mxu0 %v302
    %889 = vmatprep.subr.bf16.mxu0 0
    %890 = vmatpush1.bf16.msra.mxu0 %v303
    %891 = vmatprep.subr.bf16.mxu0 0
    %892 = vmatpush1.bf16.msra.mxu0 %v304
    %893 = vmatprep.subr.bf16.mxu0 0
    %894 = vmatpush1.bf16.msra.mxu0 0
    %895 = vmatprep.subr.bf16.mxu0 0
    %896 = vmatpush1.bf16.msra.mxu0 0
    %897 = vmatprep.subr.bf16.mxu0 0
    %898 = vmatpush1.bf16.msra.mxu0 0
    %899 = vmatprep.subr.bf16.mxu0 0
    %900 = vmatpush1.bf16.msra.mxu0 0
    %901 = vmatprep.subr.bf16.mxu0 0
    %902 = vmatpush1.bf16.msra.mxu0 0
    %903 = vmatprep.subr.bf16.mxu0 0
    %904 = vmatpush1.bf16.msra.mxu0 0
    %905 = vmatprep.subr.bf16.mxu0 0
    %906 = vmatpush1.bf16.msra.mxu0 0
    %907 = vmatprep.subr.bf16.mxu0 0
    %908 = vmatpush1.bf16.msra.mxu0 0
    %909 = vmatprep.mubr.bf16.mxu0 0
    %910 = vmatmul.mubr.bf16.gmra.mrb[0].mxu0 %v876
    %v911 = vpop.f32.mrb[0].mxu0
    %v912 = vadd.f32 0.0, %v911
    %v913 = vpop.f32.mrb[0].mxu0
    %v914 = vpop.f32.mrb[0].mxu0
    %v915 = vpop.f32.mrb[0].mxu0
    %916 = vdwg.mxu0
    %v917 = vadd.f32 %v218, %v912
    %v918 = vtanh.pop %v917
    %v919 = vpack.c.bf16 %v918, %v918
    %920 = vmatprep.subr.bf16.mxu0 0
    %921 = vmatpush1.bf16.msra.mxu0 %v388
    %922 = vmatprep.subr.bf16.mxu0 0
    %923 = vmatpush1.bf16.msra.mxu0 %v389
    %924 = vmatprep.subr.bf16.mxu0 0
    %925 = vmatpush1.bf16.msra.mxu0 %v390
    %926 = vmatprep.subr.bf16.mxu0 0
    %927 = vmatpush1.bf16.msra.mxu0 %v391
    %928 = vmatprep.subr.bf16.mxu0 0
    %929 = vmatpush1.bf16.msra.mxu0 %v392
    %930 = vmatprep.subr.bf16.mxu0 0
    %931 = vmatpush1.bf16.msra.mxu0 %v393
    %932 = vmatprep.subr.bf16.mxu0 0
    %933 = vmatpush1.bf16.msra.mxu0 %v394
    %934 = vmatprep.subr.bf16.mxu0 0
    %935 = vmatpush1.bf16.msra.mxu0 %v395
    %936 = vmatprep.subr.bf16.mxu0 0
    %937 = vmatpush1.bf16.msra.mxu0 0
    %938 = vmatprep.subr.bf16.mxu0 0
    %939 = vmatpush1.bf16.msra.mxu0 0
    %940 = vmatprep.subr.bf16.mxu0 0
    %941 = vmatpush1.bf16.msra.mxu0 0
    %942 = vmatprep.subr.bf16.mxu0 0
    %943 = vmatpush1.bf16.msra.mxu0 0
    %944 = vmatprep.subr.bf16.mxu0 0
    %945 = vmatpush1.bf16.msra.mxu0 0
    %946 = vmatprep.subr.bf16.mxu0 0
    %947 = vmatpush1.bf16.msra.mxu0 0
    %948 = vmatprep.subr.bf16.mxu0 0
    %949 = vmatpush1.bf16.msra.mxu0 0
    %950 = vmatprep.subr.bf16.mxu0 0
    %951 = vmatpush1.bf16.msra.mxu0 0
    %952 = vmatprep.mubr.bf16.mxu0 0
    %953 = vmatmul.mubr.bf16.gmra.mrb[0].mxu0 %v919
    %v954 = vpop.f32.mrb[0].mxu0
    %v955 = vadd.f32 %v261, %v954
    %v956 = vpop.f32.mrb[0].mxu0
    %v957 = vpop.f32.mrb[0].mxu0
    %v958 = vpop.f32.mrb[0].mxu0
    %959 = vdwg.mxu0
    %v960 = vtanh.pop %v955
    %v961 = vadd.f32 %v918, %v960
    %v962 = vpack.c.bf16 %v960, %v960
    %963 = vmatprep.subr.bf16.mxu0 0
    %964 = vmatpush1.bf16.msra.mxu0 %v297
    %965 = vmatprep.subr.bf16.mxu0 0
    %966 = vmatpush1.bf16.msra.mxu0 %v298
    %967 = vmatprep.subr.bf16.mxu0 0
    %968 = vmatpush1.bf16.msra.mxu0 %v299
    %969 = vmatprep.subr.bf16.mxu0 0
    %970 = vmatpush1.bf16.msra.mxu0 %v300
    %971 = vmatprep.subr.bf16.mxu0 0
    %972 = vmatpush1.bf16.msra.mxu0 %v301
    %973 = vmatprep.subr.bf16.mxu0 0
    %974 = vmatpush1.bf16.msra.mxu0 %v302
    %975 = vmatprep.subr.bf16.mxu0 0
    %976 = vmatpush1.bf16.msra.mxu0 %v303
    %977 = vmatprep.subr.bf16.mxu0 0
    %978 = vmatpush1.bf16.msra.mxu0 %v304
    %979 = vmatprep.subr.bf16.mxu0 0
    %980 = vmatpush1.bf16.msra.mxu0 0
    %981 = vmatprep.subr.bf16.mxu0 0
    %982 = vmatpush1.bf16.msra.mxu0 0
    %983 = vmatprep.subr.bf16.mxu0 0
    %984 = vmatpush1.bf16.msra.mxu0 0
    %985 = vmatprep.subr.bf16.mxu0 0
    %986 = vmatpush1.bf16.msra.mxu0 0
    %987 = vmatprep.subr.bf16.mxu0 0
    %988 = vmatpush1.bf16.msra.mxu0 0
    %989 = vmatprep.subr.bf16.mxu0 0
    %990 = vmatpush1.bf16.msra.mxu0 0
    %991 = vmatprep.subr.bf16.mxu0 0
    %992 = vmatpush1.bf16.msra.mxu0 0
    %993 = vmatprep.subr.bf16.mxu0 0
    %994 = vmatpush1.bf16.msra.mxu0 0
    %995 = vmatprep.mubr.bf16.mxu0 0
    %996 = vmatmul.mubr.bf16.gmra.mrb[0].mxu0 %v962
    %v997 = vpop.f32.mrb[0].mxu0
    %v998 = vadd.f32 0.0, %v997
    %v999 = vpop.f32.mrb[0].mxu0
    %v1000 = vpop.f32.mrb[0].mxu0
    %v1001 = vpop.f32.mrb[0].mxu0
    %1002 = vdwg.mxu0
    %v1003 = vadd.f32 %v221, %v998
    %v1004 = vtanh.pop %v1003
    %v1005 = vpack.c.bf16 %v1004, %v1004
    %1006 = vmatprep.subr.bf16.mxu0 0
    %1007 = vmatpush1.bf16.msra.mxu0 %v388
    %1008 = vmatprep.subr.bf16.mxu0 0
    %1009 = vmatpush1.bf16.msra.mxu0 %v389
    %1010 = vmatprep.subr.bf16.mxu0 0
    %1011 = vmatpush1.bf16.msra.mxu0 %v390
    %1012 = vmatprep.subr.bf16.mxu0 0
    %1013 = vmatpush1.bf16.msra.mxu0 %v391
    %1014 = vmatprep.subr.bf16.mxu0 0
    %1015 = vmatpush1.bf16.msra.mxu0 %v392
    %1016 = vmatprep.subr.bf16.mxu0 0
    %1017 = vmatpush1.bf16.msra.mxu0 %v393
    %1018 = vmatprep.subr.bf16.mxu0 0
    %1019 = vmatpush1.bf16.msra.mxu0 %v394
    %1020 = vmatprep.subr.bf16.mxu0 0
    %1021 = vmatpush1.bf16.msra.mxu0 %v395
    %1022 = vmatprep.subr.bf16.mxu0 0
    %1023 = vmatpush1.bf16.msra.mxu0 0
    %1024 = vmatprep.subr.bf16.mxu0 0
    %1025 = vmatpush1.bf16.msra.mxu0 0
    %1026 = vmatprep.subr.bf16.mxu0 0
    %1027 = vmatpush1.bf16.msra.mxu0 0
    %1028 = vmatprep.subr.bf16.mxu0 0
    %1029 = vmatpush1.bf16.msra.mxu0 0
    %1030 = vmatprep.subr.bf16.mxu0 0
    %1031 = vmatpush1.bf16.msra.mxu0 0
    %1032 = vmatprep.subr.bf16.mxu0 0
    %1033 = vmatpush1.bf16.msra.mxu0 0
    %1034 = vmatprep.subr.bf16.mxu0 0
    %1035 = vmatpush1.bf16.msra.mxu0 0
    %1036 = vmatprep.subr.bf16.mxu0 0
    %1037 = vmatpush1.bf16.msra.mxu0 0
    %1038 = vmatprep.mubr.bf16.mxu0 0
    %1039 = vmatmul.mubr.bf16.gmra.mrb[0].mxu0 %v1005
    %v1040 = vpop.f32.mrb[0].mxu0
    %v1041 = vadd.f32 %v261, %v1040
    %v1042 = vpop.f32.mrb[0].mxu0
    %v1043 = vpop.f32.mrb[0].mxu0
    %v1044 = vpop.f32.mrb[0].mxu0
    %1045 = vdwg.mxu0
    %v1046 = vtanh.pop %v1041
    %v1047 = vadd.f32 %v1004, %v1046
    %1048 = vst [vmem:[%s10] sm:$0xff] %v1046
    %v1049 = vpack.c.bf16 %v531, %v445
    %v1050 = vpack.c.bf16 %v703, %v617
    %v1051 = vpack.c.bf16 %v875, %v789
    %v1052 = vpack.c.bf16 %v1047, %v961
    %v1053 = vld [vmem:[#allocation6] sm:$0xf]
    %v1054 = vld [vmem:[#allocation6 + $0x4] sm:$0xf]
    %v1055 = vld [vmem:[#allocation6 + $0x8] sm:$0xf]
    %v1056 = vld [vmem:[#allocation6 + $0xc] sm:$0xf]
    %v1057 = vld [vmem:[#allocation6 + $0x10] sm:$0xf]
    %v1058 = vld [vmem:[#allocation6 + $0x14] sm:$0xf]
    %v1059 = vld [vmem:[#allocation6 + $0x18] sm:$0xf]
    %v1060 = vld [vmem:[#allocation6 + $0x1c] sm:$0xf]
    %v1061 = vld [vmem:[#allocation6 + $0x20] sm:$0xf]
    %v1062 = vld [vmem:[#allocation6 + $0x24] sm:$0xf]
    %v1063 = vld [vmem:[#allocation6 + $0x28] sm:$0xf]
    %v1064 = vld [vmem:[#allocation6 + $0x2c] sm:$0xf]
    %v1065 = vld [vmem:[#allocation6 + $0x30] sm:$0xf]
    %v1066 = vld [vmem:[#allocation6 + $0x34] sm:$0xf]
    %v1067 = vld [vmem:[#allocation6 + $0x38] sm:$0xf]
    %v1068 = vld [vmem:[#allocation6 + $0x3c] sm:$0xf]
    %v1069 = vld [vmem:[%s8] sm:$0x1]
    %v1071 = vlaneseq
    %v1072 = vshrl.u32 %v1071, 7
    %v1073 = vsub.s32 0, %v1072
    %v1074 = vrot.slane %v1069, %v1073
    %v1092 = vunpack.c.l.b16 %v1053
    %v1093 = vunpack.c.l.b16 %v1054
    %v1094 = vunpack.c.l.b16 %v1055
    %v1095 = vunpack.c.l.b16 %v1056
    %v1096 = vunpack.c.l.b16 %v1057
    %v1097 = vunpack.c.l.b16 %v1058
    %v1098 = vunpack.c.l.b16 %v1059
    %v1099 = vunpack.c.l.b16 %v1060
    %v1100 = vunpack.c.l.b16 %v1061
    %v1101 = vunpack.c.l.b16 %v1062
    %v1102 = vunpack.c.l.b16 %v1063
    %v1103 = vunpack.c.l.b16 %v1064
    %v1104 = vunpack.c.l.b16 %v1065
    %v1105 = vunpack.c.l.b16 %v1066
    %v1106 = vunpack.c.l.b16 %v1067
    %v1107 = vunpack.c.l.b16 %v1068
    %v1108 = vpack.c.b16 %v1093, %v1092
    %v1109 = vpack.c.b16 %v1095, %v1094
    %v1110 = vpack.c.b16 %v1097, %v1096
    %v1111 = vpack.c.b16 %v1099, %v1098
    %v1112 = vpack.c.b16 %v1101, %v1100
    %v1113 = vpack.c.b16 %v1103, %v1102
    %v1114 = vpack.c.b16 %v1105, %v1104
    %v1115 = vpack.c.b16 %v1107, %v1106
    %1124 = vmatprep.subr.bf16.mxu0 0
    %1125 = vmatpush1.bf16.msra.mxu0 %v1108
    %1126 = vmatprep.subr.bf16.mxu0 0
    %1127 = vmatpush1.bf16.msra.mxu0 %v1109
    %1128 = vmatprep.subr.bf16.mxu0 0
    %1129 = vmatpush1.bf16.msra.mxu0 %v1110
    %1130 = vmatprep.subr.bf16.mxu0 0
    %1131 = vmatpush1.bf16.msra.mxu0 %v1111
    %1132 = vmatprep.subr.bf16.mxu0 0
    %1133 = vmatpush1.bf16.msra.mxu0 %v1112
    %1134 = vmatprep.subr.bf16.mxu0 0
    %1135 = vmatpush1.bf16.msra.mxu0 %v1113
    %1136 = vmatprep.subr.bf16.mxu0 0
    %1137 = vmatpush1.bf16.msra.mxu0 %v1114
    %1138 = vmatprep.subr.bf16.mxu0 0
    %1139 = vmatpush1.bf16.msra.mxu0 %v1115
    %1140 = vmatprep.subr.bf16.mxu0 0
    %1141 = vmatpush1.bf16.msra.mxu0 0
    %1142 = vmatprep.subr.bf16.mxu0 0
    %1143 = vmatpush1.bf16.msra.mxu0 0
    %1144 = vmatprep.subr.bf16.mxu0 0
    %1145 = vmatpush1.bf16.msra.mxu0 0
    %1146 = vmatprep.subr.bf16.mxu0 0
    %1147 = vmatpush1.bf16.msra.mxu0 0
    %1148 = vmatprep.subr.bf16.mxu0 0
    %1149 = vmatpush1.bf16.msra.mxu0 0
    %1150 = vmatprep.subr.bf16.mxu0 0
    %1151 = vmatpush1.bf16.msra.mxu0 0
    %1152 = vmatprep.subr.bf16.mxu0 0
    %1153 = vmatpush1.bf16.msra.mxu0 0
    %1154 = vmatprep.subr.bf16.mxu0 0
    %1155 = vmatpush1.bf16.msra.mxu0 0
    %1156 = vmatprep.mubr.bf16.mxu0 0
    %1157 = vmatmul.mubr.bf16.gmra.mrb[0].mxu0 %v1049
    %v1158 = vpop.f32.mrb[0].mxu0
    %v1159 = vadd.f32 %v1074, %v1158
    %v1160 = vpop.f32.mrb[0].mxu0
    %v1161 = vpop.f32.mrb[0].mxu0
    %v1162 = vadd.f32 %v1074, %v1161
    %v1163 = vpop.f32.mrb[0].mxu0
    %1164 = vmatprep.mubr.bf16.mxu0 0
    %1165 = vmatmul.mubr.bf16.gmra.mrb[0].mxu0 %v1050
    %v1166 = vpop.f32.mrb[0].mxu0
    %v1167 = vadd.f32 %v1074, %v1166
    %v1168 = vpop.f32.mrb[0].mxu0
    %v1169 = vpop.f32.mrb[0].mxu0
    %v1170 = vadd.f32 %v1074, %v1169
    %v1171 = vpop.f32.mrb[0].mxu0
    %1172 = vmatprep.mubr.bf16.mxu0 0
    %1173 = vmatmul.mubr.bf16.gmra.mrb[0].mxu0 %v1051
    %v1174 = vpop.f32.mrb[0].mxu0
    %v1175 = vadd.f32 %v1074, %v1174
    %v1176 = vpop.f32.mrb[0].mxu0
    %v1177 = vpop.f32.mrb[0].mxu0
    %v1178 = vadd.f32 %v1074, %v1177
    %v1179 = vpop.f32.mrb[0].mxu0
    %1180 = vmatprep.mubr.bf16.mxu0 0
    %1181 = vmatmul.mubr.bf16.gmra.mrb[0].mxu0 %v1052
    %v1182 = vpop.f32.mrb[0].mxu0
    %v1183 = vadd.f32 %v1074, %v1182
    %v1184 = vpop.f32.mrb[0].mxu0
    %v1185 = vpop.f32.mrb[0].mxu0
    %v1186 = vadd.f32 %v1074, %v1185
    %v1187 = vpop.f32.mrb[0].mxu0
    %1188 = vdwg.mxu0
    %1189 = vst [vmem:[%s9] sm:$0xff] %v1159
    %1190 = vst [vmem:[%s9 + $0x8] sm:$0xff] %v1162
    %1191 = vst [vmem:[%s9 + $0x10] sm:$0xff] %v1167
    %1192 = vst [vmem:[%s9 + $0x18] sm:$0xff] %v1170
    %1193 = vst [vmem:[%s9 + $0x20] sm:$0xff] %v1175
    %1194 = vst [vmem:[%s9 + $0x28] sm:$0xff] %v1178
    %1195 = vst [vmem:[%s9 + $0x30] sm:$0xff] %v1183
    %1196 = vst [vmem:[%s9 + $0x38] sm:$0xff] %v1186
    // Predicated region
    $region50: #{inner_network_forward.1} parent=1 // pred_check
      _
    $region51: #{inner_network_forward.1} parent=1 // pred_check_branch
      %1198 = sbr.rel (0) target = $region53
    $region52: #{inner_network_forward.1} parent=1 // pred_region
      _
    $region53: #{inner_network_forward.1} parent=1 // pred_fallthru
      _
    // Predicated region
    $region54: #{inner_network_forward.1} parent=1 // pred_check
      _
    $region55: #{inner_network_forward.1} parent=1 // pred_check_branch
      %1200 = sbr.rel (0) target = $region57
    $region56: #{inner_network_forward.1} parent=1 // pred_region
      _
    $region57: #{inner_network_forward.1} parent=1 // pred_fallthru
      _
    // Predicated region
    $region58: #{inner_network_forward.1} parent=1 // pred_check
      _
    $region59: #{inner_network_forward.1} parent=1 // pred_check_branch
      %1202 = sbr.rel (0) target = $region61
    $region60: #{inner_network_forward.1} parent=1 // pred_region
      _
    $region61: #{inner_network_forward.1} parent=1 // pred_fallthru
      _
    // Predicated region
    $region62: #{inner_network_forward.1} parent=1 // pred_check
      _
    $region63: #{inner_network_forward.1} parent=1 // pred_check_branch
      %1204 = sbr.rel (0) target = $region65
    $region64: #{inner_network_forward.1} parent=1 // pred_region
      _
    $region65: #{inner_network_forward.1} parent=1 // pred_fallthru
      _
    %1205 = vsyncpa [#allocation3], 1
    %1206 = vsyncpa [#allocation5], 1

</llo_original>
